<compile_context>
chip_gen: v7x
topology: tpu7x:2x2x1
jax: 0.10.0
libtpu: 0.0.40
codegen_flags: <defaults>
</compile_context>

<pallas_src>
import jax
import jax.numpy as jnp
from jax import lax
from jax.experimental import pallas as pl
from jax.experimental.pallas import tpu as pltpu

# ----- model dims (small, consistent with the module) -----
VOCAB_SIZE = 100
EMBEDDING_DIM = 32
HIDDEN_DIM = 32
NUM_LABELS = 2
MAX_LENGTH = 8   # T
BATCH = 2

B_PAD = 8        # pad batch to one full sublane group
LANES = 128      # lane-dense (padded) fc output width
V_PAD = 128      # vocab padded to a full lane width (MXU K dim of the one-hot matmul)


def _lstm_fc_kernel(ids_ref, emb_ref, wih_ref, whh_ref, b_ref, fcw_ref, fcb_ref,
                    out_ref, pg_ref):
    """Fused one-hot embedding gather + input projection + backward LSTM + fc.

    ids_ref : (T*B_PAD, 1)   int32, VMEM  time-reversed, batch-padded ids (-1 = pad row)
    emb_ref : (V_PAD, E)     f32
    wih_ref : (E, 4H)        f32           W_ih^T (reverse direction)
    whh_ref : (H, 4H)        f32           W_hh^T (reverse direction)
    b_ref   : (1, 4H)        f32           b_ih + b_hh
    fcw_ref : (H, LANES)     f32           fc weight^T, zero-padded lanes
    fcb_ref : (1, LANES)     f32
    out_ref : (B_PAD, LANES) f32
    pg_ref  : (T, B_PAD, 4H) f32 scratch   per-step pre-activation gates (time-reversed)
    """
    TB = ids_ref.shape[0]
    V_pad = emb_ref.shape[0]
    H = whh_ref.shape[0]
    T = pg_ref.shape[0]
    B_pad = pg_ref.shape[1]

    # Phase 0 - one-hot gather-matmul: VPU compare builds the (TB, V_PAD) one-hot, then
    # two small MXU calls produce all pre-activation gates for every timestep at once.
    # No scalar-indexed gathers, no O(V) projection, no pg zero-init (all rows written).
    onehot = (lax.broadcasted_iota(jnp.int32, (TB, V_pad), 1)
              == ids_ref[...]).astype(jnp.float32)                       # (TB, V_PAD)
    x = jnp.dot(onehot, emb_ref[...], preferred_element_type=jnp.float32)  # (TB, E)
    pg = jnp.dot(x, wih_ref[...], preferred_element_type=jnp.float32) + b_ref[...]
    pg_ref[...] = pg.reshape(T, B_pad, 4 * H)

    # Phase 1 - recurrence: only h @ W_hh + activations remain on the serial chain.
    whh = whh_ref[...]

    def step(t, carry):
        h, c = carry
        gates = pg_ref[t] + jnp.dot(h, whh, preferred_element_type=jnp.float32)  # (B_pad, 4H)
        s = jax.nn.sigmoid(gates)            # one full-vreg EUP op: [ i | f | . | o ]
        u = jnp.tanh(gates)                  # one full-vreg EUP op: [ . | . | g | . ]
        i = s[:, 0 * H:1 * H]
        f = s[:, 1 * H:2 * H]
        g = u[:, 2 * H:3 * H]
        o = s[:, 3 * H:4 * H]
        c = f * c + i * g
        h = o * jnp.tanh(c)
        return (h, c)

    h0 = jnp.zeros((B_pad, H), jnp.float32)
    c0 = jnp.zeros((B_pad, H), jnp.float32)
    h_final, _ = lax.fori_loop(0, T, step, (h0, c0), unroll=True)

    # Phase 2 - fc(hidden[-1]) into a lane-dense (B_PAD, 128) tile (unmasked stores).
    out_ref[...] = (
        jnp.dot(h_final, fcw_ref[...], preferred_element_type=jnp.float32)
        + fcb_ref[...])


def prepare_params(params):
    """One-time parameter prep (transposes, bias fold, zero-padding) off the call path."""
    H, L, E = HIDDEN_DIM, NUM_LABELS, EMBEDDING_DIM
    emb = params["embedding"].astype(jnp.float32)
    V = emb.shape[0]
    assert V <= V_PAD
    emb_pad = jnp.zeros((V_PAD, E), jnp.float32).at[:V, :].set(emb)
    wih_t = jnp.transpose(params["w_ih_reverse"]).astype(jnp.float32)   # (E, 4H)
    whh_t = jnp.transpose(params["w_hh_reverse"]).astype(jnp.float32)   # (H, 4H)
    b = (params["b_ih_reverse"] + params["b_hh_reverse"]).reshape(1, -1).astype(jnp.float32)
    fcw_pad = jnp.zeros((H, LANES), jnp.float32).at[:, :L].set(
        jnp.transpose(params["fc_w"]).astype(jnp.float32))
    fcb_pad = jnp.zeros((1, LANES), jnp.float32).at[:, :L].set(
        params["fc_b"].astype(jnp.float32).reshape(1, -1))
    return {
        "emb": emb_pad, "wih_t": wih_t, "whh_t": whh_t, "b": b,
        "fcw_pad": fcw_pad, "fcb_pad": fcb_pad,
    }


@jax.jit
def lstm_model_forward(input_ids, prepped):
    """Full module forward: tiny id-layout prep + a single gridless pallas_call + slice."""
    B, T = input_ids.shape
    assert B <= B_PAD
    H = prepped["whh_t"].shape[0]

    # Time-reverse, batch-pad and flatten the ids (16 ints; pad rows get -1 so their
    # one-hot row is all-zero).  Row r = t_back * B_PAD + b.
    ids_rev_t = jnp.transpose(input_ids[:, ::-1].astype(jnp.int32))          # (T, B)
    ids_cols = jnp.full((T, B_PAD), -1, jnp.int32).at[:, :B].set(ids_rev_t)  # (T, B_PAD)
    ids_flat = ids_cols.reshape(T * B_PAD, 1)                                # (T*B_PAD, 1)

    vmem = pl.BlockSpec(memory_space=pltpu.MemorySpace.VMEM)

    out_pad = pl.pallas_call(
        _lstm_fc_kernel,
        out_shape=jax.ShapeDtypeStruct((B_PAD, LANES), jnp.float32),
        in_specs=[vmem, vmem, vmem, vmem, vmem, vmem, vmem],
        out_specs=vmem,
        scratch_shapes=[
            pltpu.VMEM((T, B_PAD, 4 * H), jnp.float32),   # time-reversed pre-gates
        ],
    )(ids_flat, prepped["emb"], prepped["wih_t"], prepped["whh_t"],
      prepped["b"], prepped["fcw_pad"], prepped["fcb_pad"])
    return out_pad[:B, :NUM_LABELS]


def init_params(key):
    ks = jax.random.split(key, 7)
    scale = 0.1
    H, E, L, V = HIDDEN_DIM, EMBEDDING_DIM, NUM_LABELS, VOCAB_SIZE
    return {
        "embedding":     scale * jax.random.normal(ks[0], (V, E), jnp.float32),
        # backward-direction LSTM params (the only direction reaching the output)
        "w_ih_reverse":  scale * jax.random.normal(ks[1], (4 * H, E), jnp.float32),
        "w_hh_reverse":  scale * jax.random.normal(ks[2], (4 * H, H), jnp.float32),
        "b_ih_reverse":  scale * jax.random.normal(ks[3], (4 * H,), jnp.float32),
        "b_hh_reverse":  scale * jax.random.normal(ks[4], (4 * H,), jnp.float32),
        "fc_w":          scale * jax.random.normal(ks[5], (L, H), jnp.float32),
        "fc_b":          scale * jax.random.normal(ks[6], (L,), jnp.float32),
    }
    # TODO(synk): forward-direction LSTM weights exist in nn.LSTM but do not affect the
    # module's output (fc is applied to hidden[-1] only), so they are omitted.


def reference_forward(input_ids, params):
    """Pure-JAX reference (same math as the PyTorch module's output path)."""
    H = HIDDEN_DIM
    x = jnp.take(params["embedding"], input_ids, axis=0)          # (B, T, E)
    x_rev = x[:, ::-1, :]
    b = params["b_ih_reverse"] + params["b_hh_reverse"]

    def step(carry, x_t):
        h, c = carry
        gates = x_t @ params["w_ih_reverse"].T + h @ params["w_hh_reverse"].T + b
        i = jax.nn.sigmoid(gates[:, 0 * H:1 * H])
        f = jax.nn.sigmoid(gates[:, 1 * H:2 * H])
        g = jnp.tanh(gates[:, 2 * H:3 * H])
        o = jax.nn.sigmoid(gates[:, 3 * H:4 * H])
        c = f * c + i * g
        h = o * jnp.tanh(c)
        return (h, c), None

    B = input_ids.shape[0]
    (h, _), _ = lax.scan(step, (jnp.zeros((B, H)), jnp.zeros((B, H))),
                         jnp.transpose(x_rev, (1, 0, 2)))
    return h @ params["fc_w"].T + params["fc_b"]


if __name__ == "__main__":
    key = jax.random.PRNGKey(0)
    pkey, ikey = jax.random.split(key)
    params = init_params(pkey)
    prepped = prepare_params(params)
    input_ids = jax.random.randint(ikey, (BATCH, MAX_LENGTH), 0, VOCAB_SIZE,
                                   dtype=jnp.int32)

    out = lstm_model_forward(input_ids, prepped)
    out = jax.block_until_ready(out)

    ref = reference_forward(input_ids, params)
    assert out.shape == (BATCH, NUM_LABELS)
    assert jnp.allclose(out, ref, atol=1e-5, rtol=1e-5), "mismatch vs reference"
    print("KERNEL_OK")
</pallas_src>

<mosaic_0001>
module attributes {stable_mosaic.version = 11 : i64} {
  func.func @_lstm_fc_kernel(%arg0: memref<64x1xi32, #tpu.memory_space<vmem>>, %arg1: memref<128x32xf32, #tpu.memory_space<vmem>>, %arg2: memref<32x128xf32, #tpu.memory_space<vmem>>, %arg3: memref<32x128xf32, #tpu.memory_space<vmem>>, %arg4: memref<1x128xf32, #tpu.memory_space<vmem>>, %arg5: memref<32x128xf32, #tpu.memory_space<vmem>>, %arg6: memref<1x128xf32, #tpu.memory_space<vmem>>, %arg7: memref<8x128xf32, #tpu.memory_space<vmem>>, %arg8: memref<8x8x128xf32, #tpu.memory_space<vmem>>) attributes {dimension_semantics = [], scalar_prefetch = 0 : i64, scratch_operands = 1 : i64, tpu.core_type = #tpu.core_type<tc>} {
    %0 = tpu.iota {dimensions = array<i32: 1>} : vector<64x128xi32>
    %c0 = arith.constant 0 : index
    %c0_0 = arith.constant 0 : index
    %1 = vector.load %arg0[%c0, %c0_0] : memref<64x1xi32, #tpu.memory_space<vmem>>, vector<64x1xi32>
    %2 = vector.broadcast %1 : vector<64x1xi32> to vector<64x128xi32>
    %3 = arith.cmpi eq, %0, %2 : vector<64x128xi32>
    %4 = arith.extui %3 : vector<64x128xi1> to vector<64x128xi32>
    %5 = arith.sitofp %4 : vector<64x128xi32> to vector<64x128xf32>
    %c0_1 = arith.constant 0 : index
    %c0_2 = arith.constant 0 : index
    %6 = vector.load %arg1[%c0_1, %c0_2] : memref<128x32xf32, #tpu.memory_space<vmem>>, vector<128x32xf32>
    %cst = arith.constant dense<0.000000e+00> : vector<64x32xf32>
    %7 = tpu.matmul %5, %6, %cst {dimension_numbers = #tpu.dot_dimension_numbers<[1], [0], [0], [1], [0, 0, 1, 1], [], []>} : vector<64x128xf32>, vector<128x32xf32>, vector<64x32xf32> -> vector<64x32xf32>
    %c0_3 = arith.constant 0 : index
    %c0_4 = arith.constant 0 : index
    %8 = vector.load %arg2[%c0_3, %c0_4] : memref<32x128xf32, #tpu.memory_space<vmem>>, vector<32x128xf32>
    %cst_5 = arith.constant dense<0.000000e+00> : vector<64x128xf32>
    %9 = tpu.matmul %7, %8, %cst_5 {dimension_numbers = #tpu.dot_dimension_numbers<[1], [0], [0], [1], [0, 0, 1, 1], [], []>} : vector<64x32xf32>, vector<32x128xf32>, vector<64x128xf32> -> vector<64x128xf32>
    %c0_6 = arith.constant 0 : index
    %c0_7 = arith.constant 0 : index
    %10 = vector.load %arg4[%c0_6, %c0_7] : memref<1x128xf32, #tpu.memory_space<vmem>>, vector<1x128xf32>
    %11 = vector.broadcast %10 : vector<1x128xf32> to vector<64x128xf32>
    %12 = arith.addf %9, %11 : vector<64x128xf32>
    %13 = vector.shape_cast %12 : vector<64x128xf32> to vector<8x8x128xf32>
    %c0_8 = arith.constant 0 : index
    %c0_9 = arith.constant 0 : index
    %c0_10 = arith.constant 0 : index
    %14 = vector.load %arg8[%c0_8, %c0_9, %c0_10] : memref<8x8x128xf32, #tpu.memory_space<vmem>>, vector<8x8x128xf32>
    tpu.vector_store %arg8[%c0_8, %c0_9, %c0_10], %13 {strides = array<i32>} : memref<8x8x128xf32, #tpu.memory_space<vmem>>, vector<8x8x128xf32>,
    %c0_11 = arith.constant 0 : index
    %c0_12 = arith.constant 0 : index
    %15 = vector.load %arg3[%c0_11, %c0_12] : memref<32x128xf32, #tpu.memory_space<vmem>>, vector<32x128xf32>
    %cst_13 = arith.constant 0.000000e+00 : f32
    %16 = vector.broadcast %cst_13 : f32 to vector<8x32xf32>
    %cst_14 = arith.constant 0.000000e+00 : f32
    %17 = vector.broadcast %cst_14 : f32 to vector<8x32xf32>
    %c0_i32 = arith.constant 0 : i32
    %18 = arith.index_cast %c0_i32 : i32 to index
    %c0_15 = arith.constant 0 : index
    %c0_16 = arith.constant 0 : index
    %19 = vector.load %arg8[%18, %c0_15, %c0_16] : memref<8x8x128xf32, #tpu.memory_space<vmem>>, vector<1x8x128xf32>
    %20 = vector.shape_cast %19 : vector<1x8x128xf32> to vector<8x128xf32>
    %cst_17 = arith.constant dense<0.000000e+00> : vector<8x128xf32>
    %21 = tpu.matmul %16, %15, %cst_17 {dimension_numbers = #tpu.dot_dimension_numbers<[1], [0], [0], [1], [0, 0, 1, 1], [], []>} : vector<8x32xf32>, vector<32x128xf32>, vector<8x128xf32> -> vector<8x128xf32>
    %22 = arith.addf %20, %21 : vector<8x128xf32>
    %23 = arith.negf %22 : vector<8x128xf32>
    %24 = math.exp %23 : vector<8x128xf32>
    %cst_18 = arith.constant 1.000000e+00 : f32
    %25 = vector.broadcast %cst_18 : f32 to vector<8x128xf32>
    %26 = arith.addf %25, %24 : vector<8x128xf32>
    %27 = arith.divf %25, %26 : vector<8x128xf32>
    %28 = math.tanh %22 : vector<8x128xf32>
    %29 = vector.extract_strided_slice %27 {offsets = [0, 0], sizes = [8, 32], strides = [1, 1]} : vector<8x128xf32> to vector<8x32xf32>
    %30 = vector.extract_strided_slice %27 {offsets = [0, 32], sizes = [8, 32], strides = [1, 1]} : vector<8x128xf32> to vector<8x32xf32>
    %31 = vector.extract_strided_slice %28 {offsets = [0, 64], sizes = [8, 32], strides = [1, 1]} : vector<8x128xf32> to vector<8x32xf32>
    %32 = vector.extract_strided_slice %27 {offsets = [0, 96], sizes = [8, 32], strides = [1, 1]} : vector<8x128xf32> to vector<8x32xf32>
    %33 = arith.mulf %30, %17 : vector<8x32xf32>
    %34 = arith.mulf %29, %31 : vector<8x32xf32>
    %35 = arith.addf %33, %34 : vector<8x32xf32>
    %36 = math.tanh %35 : vector<8x32xf32>
    %37 = arith.mulf %32, %36 : vector<8x32xf32>
    %c1_i32 = arith.constant 1 : i32
    %38 = arith.index_cast %c1_i32 : i32 to index
    %c0_19 = arith.constant 0 : index
    %c0_20 = arith.constant 0 : index
    %39 = vector.load %arg8[%38, %c0_19, %c0_20] : memref<8x8x128xf32, #tpu.memory_space<vmem>>, vector<1x8x128xf32>
    %40 = vector.shape_cast %39 : vector<1x8x128xf32> to vector<8x128xf32>
    %cst_21 = arith.constant dense<0.000000e+00> : vector<8x128xf32>
    %41 = tpu.matmul %37, %15, %cst_21 {dimension_numbers = #tpu.dot_dimension_numbers<[1], [0], [0], [1], [0, 0, 1, 1], [], []>} : vector<8x32xf32>, vector<32x128xf32>, vector<8x128xf32> -> vector<8x128xf32>
    %42 = arith.addf %40, %41 : vector<8x128xf32>
    %43 = arith.negf %42 : vector<8x128xf32>
    %44 = math.exp %43 : vector<8x128xf32>
    %cst_22 = arith.constant 1.000000e+00 : f32
    %45 = vector.broadcast %cst_22 : f32 to vector<8x128xf32>
    %46 = arith.addf %45, %44 : vector<8x128xf32>
    %47 = arith.divf %45, %46 : vector<8x128xf32>
    %48 = math.tanh %42 : vector<8x128xf32>
    %49 = vector.extract_strided_slice %47 {offsets = [0, 0], sizes = [8, 32], strides = [1, 1]} : vector<8x128xf32> to vector<8x32xf32>
    %50 = vector.extract_strided_slice %47 {offsets = [0, 32], sizes = [8, 32], strides = [1, 1]} : vector<8x128xf32> to vector<8x32xf32>
    %51 = vector.extract_strided_slice %48 {offsets = [0, 64], sizes = [8, 32], strides = [1, 1]} : vector<8x128xf32> to vector<8x32xf32>
    %52 = vector.extract_strided_slice %47 {offsets = [0, 96], sizes = [8, 32], strides = [1, 1]} : vector<8x128xf32> to vector<8x32xf32>
    %53 = arith.mulf %50, %35 : vector<8x32xf32>
    %54 = arith.mulf %49, %51 : vector<8x32xf32>
    %55 = arith.addf %53, %54 : vector<8x32xf32>
    %56 = math.tanh %55 : vector<8x32xf32>
    %57 = arith.mulf %52, %56 : vector<8x32xf32>
    %c2_i32 = arith.constant 2 : i32
    %58 = arith.index_cast %c2_i32 : i32 to index
    %c0_23 = arith.constant 0 : index
    %c0_24 = arith.constant 0 : index
    %59 = vector.load %arg8[%58, %c0_23, %c0_24] : memref<8x8x128xf32, #tpu.memory_space<vmem>>, vector<1x8x128xf32>
    %60 = vector.shape_cast %59 : vector<1x8x128xf32> to vector<8x128xf32>
    %cst_25 = arith.constant dense<0.000000e+00> : vector<8x128xf32>
    %61 = tpu.matmul %57, %15, %cst_25 {dimension_numbers = #tpu.dot_dimension_numbers<[1], [0], [0], [1], [0, 0, 1, 1], [], []>} : vector<8x32xf32>, vector<32x128xf32>, vector<8x128xf32> -> vector<8x128xf32>
    %62 = arith.addf %60, %61 : vector<8x128xf32>
    %63 = arith.negf %62 : vector<8x128xf32>
    %64 = math.exp %63 : vector<8x128xf32>
    %cst_26 = arith.constant 1.000000e+00 : f32
    %65 = vector.broadcast %cst_26 : f32 to vector<8x128xf32>
    %66 = arith.addf %65, %64 : vector<8x128xf32>
    %67 = arith.divf %65, %66 : vector<8x128xf32>
    %68 = math.tanh %62 : vector<8x128xf32>
    %69 = vector.extract_strided_slice %67 {offsets = [0, 0], sizes = [8, 32], strides = [1, 1]} : vector<8x128xf32> to vector<8x32xf32>
    %70 = vector.extract_strided_slice %67 {offsets = [0, 32], sizes = [8, 32], strides = [1, 1]} : vector<8x128xf32> to vector<8x32xf32>
    %71 = vector.extract_strided_slice %68 {offsets = [0, 64], sizes = [8, 32], strides = [1, 1]} : vector<8x128xf32> to vector<8x32xf32>
    %72 = vector.extract_strided_slice %67 {offsets = [0, 96], sizes = [8, 32], strides = [1, 1]} : vector<8x128xf32> to vector<8x32xf32>
    %73 = arith.mulf %70, %55 : vector<8x32xf32>
    %74 = arith.mulf %69, %71 : vector<8x32xf32>
    %75 = arith.addf %73, %74 : vector<8x32xf32>
    %76 = math.tanh %75 : vector<8x32xf32>
    %77 = arith.mulf %72, %76 : vector<8x32xf32>
    %c3_i32 = arith.constant 3 : i32
    %78 = arith.index_cast %c3_i32 : i32 to index
    %c0_27 = arith.constant 0 : index
    %c0_28 = arith.constant 0 : index
    %79 = vector.load %arg8[%78, %c0_27, %c0_28] : memref<8x8x128xf32, #tpu.memory_space<vmem>>, vector<1x8x128xf32>
    %80 = vector.shape_cast %79 : vector<1x8x128xf32> to vector<8x128xf32>
    %cst_29 = arith.constant dense<0.000000e+00> : vector<8x128xf32>
    %81 = tpu.matmul %77, %15, %cst_29 {dimension_numbers = #tpu.dot_dimension_numbers<[1], [0], [0], [1], [0, 0, 1, 1], [], []>} : vector<8x32xf32>, vector<32x128xf32>, vector<8x128xf32> -> vector<8x128xf32>
    %82 = arith.addf %80, %81 : vector<8x128xf32>
    %83 = arith.negf %82 : vector<8x128xf32>
    %84 = math.exp %83 : vector<8x128xf32>
    %cst_30 = arith.constant 1.000000e+00 : f32
    %85 = vector.broadcast %cst_30 : f32 to vector<8x128xf32>
    %86 = arith.addf %85, %84 : vector<8x128xf32>
    %87 = arith.divf %85, %86 : vector<8x128xf32>
    %88 = math.tanh %82 : vector<8x128xf32>
    %89 = vector.extract_strided_slice %87 {offsets = [0, 0], sizes = [8, 32], strides = [1, 1]} : vector<8x128xf32> to vector<8x32xf32>
    %90 = vector.extract_strided_slice %87 {offsets = [0, 32], sizes = [8, 32], strides = [1, 1]} : vector<8x128xf32> to vector<8x32xf32>
    %91 = vector.extract_strided_slice %88 {offsets = [0, 64], sizes = [8, 32], strides = [1, 1]} : vector<8x128xf32> to vector<8x32xf32>
    %92 = vector.extract_strided_slice %87 {offsets = [0, 96], sizes = [8, 32], strides = [1, 1]} : vector<8x128xf32> to vector<8x32xf32>
    %93 = arith.mulf %90, %75 : vector<8x32xf32>
    %94 = arith.mulf %89, %91 : vector<8x32xf32>
    %95 = arith.addf %93, %94 : vector<8x32xf32>
    %96 = math.tanh %95 : vector<8x32xf32>
    %97 = arith.mulf %92, %96 : vector<8x32xf32>
    %c4_i32 = arith.constant 4 : i32
    %98 = arith.index_cast %c4_i32 : i32 to index
    %c0_31 = arith.constant 0 : index
    %c0_32 = arith.constant 0 : index
    %99 = vector.load %arg8[%98, %c0_31, %c0_32] : memref<8x8x128xf32, #tpu.memory_space<vmem>>, vector<1x8x128xf32>
    %100 = vector.shape_cast %99 : vector<1x8x128xf32> to vector<8x128xf32>
    %cst_33 = arith.constant dense<0.000000e+00> : vector<8x128xf32>
    %101 = tpu.matmul %97, %15, %cst_33 {dimension_numbers = #tpu.dot_dimension_numbers<[1], [0], [0], [1], [0, 0, 1, 1], [], []>} : vector<8x32xf32>, vector<32x128xf32>, vector<8x128xf32> -> vector<8x128xf32>
    %102 = arith.addf %100, %101 : vector<8x128xf32>
    %103 = arith.negf %102 : vector<8x128xf32>
    %104 = math.exp %103 : vector<8x128xf32>
    %cst_34 = arith.constant 1.000000e+00 : f32
    %105 = vector.broadcast %cst_34 : f32 to vector<8x128xf32>
    %106 = arith.addf %105, %104 : vector<8x128xf32>
    %107 = arith.divf %105, %106 : vector<8x128xf32>
    %108 = math.tanh %102 : vector<8x128xf32>
    %109 = vector.extract_strided_slice %107 {offsets = [0, 0], sizes = [8, 32], strides = [1, 1]} : vector<8x128xf32> to vector<8x32xf32>
    %110 = vector.extract_strided_slice %107 {offsets = [0, 32], sizes = [8, 32], strides = [1, 1]} : vector<8x128xf32> to vector<8x32xf32>
    %111 = vector.extract_strided_slice %108 {offsets = [0, 64], sizes = [8, 32], strides = [1, 1]} : vector<8x128xf32> to vector<8x32xf32>
    %112 = vector.extract_strided_slice %107 {offsets = [0, 96], sizes = [8, 32], strides = [1, 1]} : vector<8x128xf32> to vector<8x32xf32>
    %113 = arith.mulf %110, %95 : vector<8x32xf32>
    %114 = arith.mulf %109, %111 : vector<8x32xf32>
    %115 = arith.addf %113, %114 : vector<8x32xf32>
    %116 = math.tanh %115 : vector<8x32xf32>
    %117 = arith.mulf %112, %116 : vector<8x32xf32>
    %c5_i32 = arith.constant 5 : i32
    %118 = arith.index_cast %c5_i32 : i32 to index
    %c0_35 = arith.constant 0 : index
    %c0_36 = arith.constant 0 : index
    %119 = vector.load %arg8[%118, %c0_35, %c0_36] : memref<8x8x128xf32, #tpu.memory_space<vmem>>, vector<1x8x128xf32>
    %120 = vector.shape_cast %119 : vector<1x8x128xf32> to vector<8x128xf32>
    %cst_37 = arith.constant dense<0.000000e+00> : vector<8x128xf32>
    %121 = tpu.matmul %117, %15, %cst_37 {dimension_numbers = #tpu.dot_dimension_numbers<[1], [0], [0], [1], [0, 0, 1, 1], [], []>} : vector<8x32xf32>, vector<32x128xf32>, vector<8x128xf32> -> vector<8x128xf32>
    %122 = arith.addf %120, %121 : vector<8x128xf32>
    %123 = arith.negf %122 : vector<8x128xf32>
    %124 = math.exp %123 : vector<8x128xf32>
    %cst_38 = arith.constant 1.000000e+00 : f32
    %125 = vector.broadcast %cst_38 : f32 to vector<8x128xf32>
    %126 = arith.addf %125, %124 : vector<8x128xf32>
    %127 = arith.divf %125, %126 : vector<8x128xf32>
    %128 = math.tanh %122 : vector<8x128xf32>
    %129 = vector.extract_strided_slice %127 {offsets = [0, 0], sizes = [8, 32], strides = [1, 1]} : vector<8x128xf32> to vector<8x32xf32>
    %130 = vector.extract_strided_slice %127 {offsets = [0, 32], sizes = [8, 32], strides = [1, 1]} : vector<8x128xf32> to vector<8x32xf32>
    %131 = vector.extract_strided_slice %128 {offsets = [0, 64], sizes = [8, 32], strides = [1, 1]} : vector<8x128xf32> to vector<8x32xf32>
    %132 = vector.extract_strided_slice %127 {offsets = [0, 96], sizes = [8, 32], strides = [1, 1]} : vector<8x128xf32> to vector<8x32xf32>
    %133 = arith.mulf %130, %115 : vector<8x32xf32>
    %134 = arith.mulf %129, %131 : vector<8x32xf32>
    %135 = arith.addf %133, %134 : vector<8x32xf32>
    %136 = math.tanh %135 : vector<8x32xf32>
    %137 = arith.mulf %132, %136 : vector<8x32xf32>
    %c6_i32 = arith.constant 6 : i32
    %138 = arith.index_cast %c6_i32 : i32 to index
    %c0_39 = arith.constant 0 : index
    %c0_40 = arith.constant 0 : index
    %139 = vector.load %arg8[%138, %c0_39, %c0_40] : memref<8x8x128xf32, #tpu.memory_space<vmem>>, vector<1x8x128xf32>
    %140 = vector.shape_cast %139 : vector<1x8x128xf32> to vector<8x128xf32>
    %cst_41 = arith.constant dense<0.000000e+00> : vector<8x128xf32>
    %141 = tpu.matmul %137, %15, %cst_41 {dimension_numbers = #tpu.dot_dimension_numbers<[1], [0], [0], [1], [0, 0, 1, 1], [], []>} : vector<8x32xf32>, vector<32x128xf32>, vector<8x128xf32> -> vector<8x128xf32>
    %142 = arith.addf %140, %141 : vector<8x128xf32>
    %143 = arith.negf %142 : vector<8x128xf32>
    %144 = math.exp %143 : vector<8x128xf32>
    %cst_42 = arith.constant 1.000000e+00 : f32
    %145 = vector.broadcast %cst_42 : f32 to vector<8x128xf32>
    %146 = arith.addf %145, %144 : vector<8x128xf32>
    %147 = arith.divf %145, %146 : vector<8x128xf32>
    %148 = math.tanh %142 : vector<8x128xf32>
    %149 = vector.extract_strided_slice %147 {offsets = [0, 0], sizes = [8, 32], strides = [1, 1]} : vector<8x128xf32> to vector<8x32xf32>
    %150 = vector.extract_strided_slice %147 {offsets = [0, 32], sizes = [8, 32], strides = [1, 1]} : vector<8x128xf32> to vector<8x32xf32>
    %151 = vector.extract_strided_slice %148 {offsets = [0, 64], sizes = [8, 32], strides = [1, 1]} : vector<8x128xf32> to vector<8x32xf32>
    %152 = vector.extract_strided_slice %147 {offsets = [0, 96], sizes = [8, 32], strides = [1, 1]} : vector<8x128xf32> to vector<8x32xf32>
    %153 = arith.mulf %150, %135 : vector<8x32xf32>
    %154 = arith.mulf %149, %151 : vector<8x32xf32>
    %155 = arith.addf %153, %154 : vector<8x32xf32>
    %156 = math.tanh %155 : vector<8x32xf32>
    %157 = arith.mulf %152, %156 : vector<8x32xf32>
    %c7_i32 = arith.constant 7 : i32
    %158 = arith.index_cast %c7_i32 : i32 to index
    %c0_43 = arith.constant 0 : index
    %c0_44 = arith.constant 0 : index
    %159 = vector.load %arg8[%158, %c0_43, %c0_44] : memref<8x8x128xf32, #tpu.memory_space<vmem>>, vector<1x8x128xf32>
    %160 = vector.shape_cast %159 : vector<1x8x128xf32> to vector<8x128xf32>
    %cst_45 = arith.constant dense<0.000000e+00> : vector<8x128xf32>
    %161 = tpu.matmul %157, %15, %cst_45 {dimension_numbers = #tpu.dot_dimension_numbers<[1], [0], [0], [1], [0, 0, 1, 1], [], []>} : vector<8x32xf32>, vector<32x128xf32>, vector<8x128xf32> -> vector<8x128xf32>
    %162 = arith.addf %160, %161 : vector<8x128xf32>
    %163 = arith.negf %162 : vector<8x128xf32>
    %164 = math.exp %163 : vector<8x128xf32>
    %cst_46 = arith.constant 1.000000e+00 : f32
    %165 = vector.broadcast %cst_46 : f32 to vector<8x128xf32>
    %166 = arith.addf %165, %164 : vector<8x128xf32>
    %167 = arith.divf %165, %166 : vector<8x128xf32>
    %168 = math.tanh %162 : vector<8x128xf32>
    %169 = vector.extract_strided_slice %167 {offsets = [0, 0], sizes = [8, 32], strides = [1, 1]} : vector<8x128xf32> to vector<8x32xf32>
    %170 = vector.extract_strided_slice %167 {offsets = [0, 32], sizes = [8, 32], strides = [1, 1]} : vector<8x128xf32> to vector<8x32xf32>
    %171 = vector.extract_strided_slice %168 {offsets = [0, 64], sizes = [8, 32], strides = [1, 1]} : vector<8x128xf32> to vector<8x32xf32>
    %172 = vector.extract_strided_slice %167 {offsets = [0, 96], sizes = [8, 32], strides = [1, 1]} : vector<8x128xf32> to vector<8x32xf32>
    %173 = arith.mulf %170, %155 : vector<8x32xf32>
    %174 = arith.mulf %169, %171 : vector<8x32xf32>
    %175 = arith.addf %173, %174 : vector<8x32xf32>
    %176 = math.tanh %175 : vector<8x32xf32>
    %177 = arith.mulf %172, %176 : vector<8x32xf32>
    %c8_i32 = arith.constant 8 : i32
    %c0_47 = arith.constant 0 : index
    %c0_48 = arith.constant 0 : index
    %178 = vector.load %arg5[%c0_47, %c0_48] : memref<32x128xf32, #tpu.memory_space<vmem>>, vector<32x128xf32>
    %cst_49 = arith.constant dense<0.000000e+00> : vector<8x128xf32>
    %179 = tpu.matmul %177, %178, %cst_49 {dimension_numbers = #tpu.dot_dimension_numbers<[1], [0], [0], [1], [0, 0, 1, 1], [], []>} : vector<8x32xf32>, vector<32x128xf32>, vector<8x128xf32> -> vector<8x128xf32>
    %c0_50 = arith.constant 0 : index
    %c0_51 = arith.constant 0 : index
    %180 = vector.load %arg6[%c0_50, %c0_51] : memref<1x128xf32, #tpu.memory_space<vmem>>, vector<1x128xf32>
    %181 = vector.broadcast %180 : vector<1x128xf32> to vector<8x128xf32>
    %182 = arith.addf %179, %181 : vector<8x128xf32>
    %c0_52 = arith.constant 0 : index
    %c0_53 = arith.constant 0 : index
    %183 = vector.load %arg7[%c0_52, %c0_53] : memref<8x128xf32, #tpu.memory_space<vmem>>, vector<8x128xf32>
    tpu.vector_store %arg7[%c0_52, %c0_53], %182 {strides = array<i32>} : memref<8x128xf32, #tpu.memory_space<vmem>>, vector<8x128xf32>,
    return
  }
}

</mosaic_0001>

<llo_original>
// kernel: lstm_model_forward.1
$region0: #{lstm_model_forward.1}
  #allocation0 [shape = 'u32[]', space=smem, size = 0x4, offset = 0x4, fixed_abs, tag = 'smem constant byte address 0x4 - core index']
  #allocation1 [shape = 'u32[144,128]{1,0:T(1,128)}', space=vmem, size = 0x12000, scoped, tag = 'internal scratch']
  #allocation2 [shape = 'f32[8,8,128]{2,1,0:T(8,128)}', space=vmem, size = 0x8000, scoped, tag = 'scratch operand']
  %s0 = inlined_call_operand.vmem [shape: s32[64,1], index: 0, kind: input, shape index: {}]
  %s1 = inlined_call_operand.vmem [shape: f32[128,32], index: 1, kind: input, shape index: {}]
  %s2 = inlined_call_operand.vmem [shape: f32[32,128], index: 2, kind: input, shape index: {}]
  %s3 = inlined_call_operand.vmem [shape: f32[32,128], index: 3, kind: input, shape index: {}]
  %s4 = inlined_call_operand.vmem [shape: f32[1,128], index: 4, kind: input, shape index: {}]
  %s5 = inlined_call_operand.vmem [shape: f32[32,128], index: 5, kind: input, shape index: {}]
  %s6 = inlined_call_operand.vmem [shape: f32[1,128], index: 6, kind: input, shape index: {}]
  %s7 = inlined_call_operand.vmem [shape: f32[8,128], index: 7, kind: output, shape index: {}]
  %s8 = sld [smem:[#allocation0]]
  $region38: #{lstm_model_forward.1} parent=0
    _
  %s10 = ssub.s32 1, %s8
  %s11 = scalar_select 0, %s10, %s8
  // Predicated region
  $region2: #{lstm_model_forward.1} parent=0 // pred_check
    _
  $region3: #{lstm_model_forward.1} parent=0 // pred_check_branch
    %13 = sbr.rel (0) target = $region5
  $region4: #{lstm_model_forward.1} parent=0 // pred_region
    _
  $region5: #{lstm_model_forward.1} parent=0 // pred_fallthru
    _
  // Predicated region
  $region6: #{lstm_model_forward.1} parent=0 // pred_check
    _
  $region7: #{lstm_model_forward.1} parent=0 // pred_check_branch
    %15 = sbr.rel (0) target = $region9
  $region8: #{lstm_model_forward.1} parent=0 // pred_region
    _
  $region9: #{lstm_model_forward.1} parent=0 // pred_fallthru
    _
  // Predicated region
  $region10: #{lstm_model_forward.1} parent=0 // pred_check
    _
  $region11: #{lstm_model_forward.1} parent=0 // pred_check_branch
    %17 = sbr.rel (0) target = $region13
  $region12: #{lstm_model_forward.1} parent=0 // pred_region
    _
  $region13: #{lstm_model_forward.1} parent=0 // pred_fallthru
    _
  // Predicated region
  $region14: #{lstm_model_forward.1} parent=0 // pred_check
    _
  $region15: #{lstm_model_forward.1} parent=0 // pred_check_branch
    %19 = sbr.rel (0) target = $region17
  $region16: #{lstm_model_forward.1} parent=0 // pred_region
    _
  $region17: #{lstm_model_forward.1} parent=0 // pred_fallthru
    _
  // Predicated region
  $region18: #{lstm_model_forward.1} parent=0 // pred_check
    _
  $region19: #{lstm_model_forward.1} parent=0 // pred_check_branch
    %21 = sbr.rel (0) target = $region21
  $region20: #{lstm_model_forward.1} parent=0 // pred_region
    _
  $region21: #{lstm_model_forward.1} parent=0 // pred_fallthru
    _
  // Predicated region
  $region22: #{lstm_model_forward.1} parent=0 // pred_check
    _
  $region23: #{lstm_model_forward.1} parent=0 // pred_check_branch
    %23 = sbr.rel (0) target = $region25
  $region24: #{lstm_model_forward.1} parent=0 // pred_region
    _
  $region25: #{lstm_model_forward.1} parent=0 // pred_fallthru
    _
  // Predicated region
  $region26: #{lstm_model_forward.1} parent=0 // pred_check
    _
  $region27: #{lstm_model_forward.1} parent=0 // pred_check_branch
    %25 = sbr.rel (0) target = $region29
  $region28: #{lstm_model_forward.1} parent=0 // pred_region
    _
  $region29: #{lstm_model_forward.1} parent=0 // pred_fallthru
    _
  %v26 = vlaneseq
  %v27 = vand.u32 %v26, 127
  %v28 = vld [vmem:[%s0] sm:$0xff]
  %v29 = vld [vmem:[%s0 + $0x8] sm:$0xff]
  %v30 = vld [vmem:[%s0 + $0x10] sm:$0xff]
  %v31 = vld [vmem:[%s0 + $0x18] sm:$0xff]
  %v32 = vld [vmem:[%s0 + $0x20] sm:$0xff]
  %v33 = vld [vmem:[%s0 + $0x28] sm:$0xff]
  %v34 = vld [vmem:[%s0 + $0x30] sm:$0xff]
  %v35 = vld [vmem:[%s0 + $0x38] sm:$0xff]
  %36 = vset.pattern.permute.xlu0 0
  %37 = vperm.xlu0 %36, %v28
  %v38 = vpop.permute.xlu0 %37
  %39 = vset.pattern.permute.xlu0 0
  %40 = vperm.xlu0 %39, %v29
  %v41 = vpop.permute.xlu0 %40
  %42 = vset.pattern.permute.xlu0 0
  %43 = vperm.xlu0 %42, %v30
  %v44 = vpop.permute.xlu0 %43
  %45 = vset.pattern.permute.xlu0 0
  %46 = vperm.xlu0 %45, %v31
  %v47 = vpop.permute.xlu0 %46
  %48 = vset.pattern.permute.xlu0 0
  %49 = vperm.xlu0 %48, %v32
  %v50 = vpop.permute.xlu0 %49
  %51 = vset.pattern.permute.xlu0 0
  %52 = vperm.xlu0 %51, %v33
  %v53 = vpop.permute.xlu0 %52
  %54 = vset.pattern.permute.xlu0 0
  %55 = vperm.xlu0 %54, %v34
  %v56 = vpop.permute.xlu0 %55
  %57 = vset.pattern.permute.xlu0 0
  %58 = vperm.xlu0 %57, %v35
  %v59 = vpop.permute.xlu0 %58
  %vm60 = vcmp.eq.s32.totalorder %v27, %v38
  %vm61 = vcmp.eq.s32.totalorder %v27, %v41
  %vm62 = vcmp.eq.s32.totalorder %v27, %v44
  %vm63 = vcmp.eq.s32.totalorder %v27, %v47
  %vm64 = vcmp.eq.s32.totalorder %v27, %v50
  %vm65 = vcmp.eq.s32.totalorder %v27, %v53
  %vm66 = vcmp.eq.s32.totalorder %v27, %v56
  %vm67 = vcmp.eq.s32.totalorder %v27, %v59
  %v68 = vsel %vm60, 1, 0
  %v69 = vsel %vm61, 1, 0
  %v70 = vsel %vm62, 1, 0
  %v71 = vsel %vm63, 1, 0
  %v72 = vsel %vm64, 1, 0
  %v73 = vsel %vm65, 1, 0
  %v74 = vsel %vm66, 1, 0
  %v75 = vsel %vm67, 1, 0
  %v76 = vcvt.s32.f32 %v68
  %v77 = vcvt.s32.f32 %v69
  %v78 = vcvt.s32.f32 %v70
  %v79 = vcvt.s32.f32 %v71
  %v80 = vcvt.s32.f32 %v72
  %v81 = vcvt.s32.f32 %v73
  %v82 = vcvt.s32.f32 %v74
  %v83 = vcvt.s32.f32 %v75
  %v84 = vld [vmem:[%s1] sm:$0xff]
  %v85 = vld [vmem:[%s1 + $0x8] sm:$0xff]
  %v86 = vld [vmem:[%s1 + $0x10] sm:$0xff]
  %v87 = vld [vmem:[%s1 + $0x18] sm:$0xff]
  %v88 = vld [vmem:[%s1 + $0x20] sm:$0xff]
  %v89 = vld [vmem:[%s1 + $0x28] sm:$0xff]
  %v90 = vld [vmem:[%s1 + $0x30] sm:$0xff]
  %v91 = vld [vmem:[%s1 + $0x38] sm:$0xff]
  %v92 = vld [vmem:[%s1 + $0x40] sm:$0xff]
  %v93 = vld [vmem:[%s1 + $0x48] sm:$0xff]
  %v94 = vld [vmem:[%s1 + $0x50] sm:$0xff]
  %v95 = vld [vmem:[%s1 + $0x58] sm:$0xff]
  %v96 = vld [vmem:[%s1 + $0x60] sm:$0xff]
  %v97 = vld [vmem:[%s1 + $0x68] sm:$0xff]
  %v98 = vld [vmem:[%s1 + $0x70] sm:$0xff]
  %v99 = vld [vmem:[%s1 + $0x78] sm:$0xff]
  %100 = vmatprep.subr.mxu0 0.0
  %101 = vmatpush1.msra.mxu0 %v84
  %102 = vmatprep.subr.mxu0 0.0
  %103 = vmatpush1.msra.mxu0 %v85
  %104 = vmatprep.subr.mxu0 0.0
  %105 = vmatpush1.msra.mxu0 %v86
  %106 = vmatprep.subr.mxu0 0.0
  %107 = vmatpush1.msra.mxu0 %v87
  %108 = vmatprep.subr.mxu0 0.0
  %109 = vmatpush1.msra.mxu0 %v88
  %110 = vmatprep.subr.mxu0 0.0
  %111 = vmatpush1.msra.mxu0 %v89
  %112 = vmatprep.subr.mxu0 0.0
  %113 = vmatpush1.msra.mxu0 %v90
  %114 = vmatprep.subr.mxu0 0.0
  %115 = vmatpush1.msra.mxu0 %v91
  %116 = vmatprep.subr.mxu0 0.0
  %117 = vmatpush1.msra.mxu0 %v92
  %118 = vmatprep.subr.mxu0 0.0
  %119 = vmatpush1.msra.mxu0 %v93
  %120 = vmatprep.subr.mxu0 0.0
  %121 = vmatpush1.msra.mxu0 %v94
  %122 = vmatprep.subr.mxu0 0.0
  %123 = vmatpush1.msra.mxu0 %v95
  %124 = vmatprep.subr.mxu0 0.0
  %125 = vmatpush1.msra.mxu0 %v96
  %126 = vmatprep.subr.mxu0 0.0
  %127 = vmatpush1.msra.mxu0 %v97
  %128 = vmatprep.subr.mxu0 0.0
  %129 = vmatpush1.msra.mxu0 %v98
  %130 = vmatprep.subr.mxu0 0.0
  %131 = vmatpush1.msra.mxu0 %v99
  %132 = vmatprep.subr.mxu0 0.0
  %133 = vmatpush1.msra.mxu0 0.0
  %134 = vmatprep.subr.mxu0 0.0
  %135 = vmatpush1.msra.mxu0 0.0
  %136 = vmatprep.subr.mxu0 0.0
  %137 = vmatpush1.msra.mxu0 0.0
  %138 = vmatprep.subr.mxu0 0.0
  %139 = vmatpush1.msra.mxu0 0.0
  %140 = vmatprep.subr.mxu0 0.0
  %141 = vmatpush1.msra.mxu0 0.0
  %142 = vmatprep.subr.mxu0 0.0
  %143 = vmatpush1.msra.mxu0 0.0
  %144 = vmatprep.subr.mxu0 0.0
  %145 = vmatpush1.msra.mxu0 0.0
  %146 = vmatprep.subr.mxu0 0.0
  %147 = vmatpush1.msra.mxu0 0.0
  %148 = vmatprep.subr.mxu0 0.0
  %149 = vmatpush1.msra.mxu0 0.0
  %150 = vmatprep.subr.mxu0 0.0
  %151 = vmatpush1.msra.mxu0 0.0
  %152 = vmatprep.subr.mxu0 0.0
  %153 = vmatpush1.msra.mxu0 0.0
  %154 = vmatprep.subr.mxu0 0.0
  %155 = vmatpush1.msra.mxu0 0.0
  %156 = vmatprep.subr.mxu0 0.0
  %157 = vmatpush1.msra.mxu0 0.0
  %158 = vmatprep.subr.mxu0 0.0
  %159 = vmatpush1.msra.mxu0 0.0
  %160 = vmatprep.subr.mxu0 0.0
  %161 = vmatpush1.msra.mxu0 0.0
  %162 = vmatprep.subr.mxu0 0.0
  %163 = vmatpush1.msra.mxu0 0.0
  %164 = vmatprep.mubr.f32.mxu0 0.0
  %165 = vmatmul.mubr.f32.gmra.mrb[0].mxu0 %v76
  %v166 = vpop.f32.mrb[0].mxu0
  %v167 = vadd.f32 0.0, %v166
  %v168 = vpop.f32.mrb[0].mxu0
  %169 = vmatprep.mubr.f32.mxu0 0.0
  %170 = vmatmul.mubr.f32.gmra.mrb[0].mxu0 %v77
  %v171 = vpop.f32.mrb[0].mxu0
  %v172 = vadd.f32 0.0, %v171
  %v173 = vpop.f32.mrb[0].mxu0
  %174 = vmatprep.mubr.f32.mxu0 0.0
  %175 = vmatmul.mubr.f32.gmra.mrb[0].mxu0 %v78
  %v176 = vpop.f32.mrb[0].mxu0
  %v177 = vadd.f32 0.0, %v176
  %v178 = vpop.f32.mrb[0].mxu0
  %179 = vmatprep.mubr.f32.mxu0 0.0
  %180 = vmatmul.mubr.f32.gmra.mrb[0].mxu0 %v79
  %v181 = vpop.f32.mrb[0].mxu0
  %v182 = vadd.f32 0.0, %v181
  %v183 = vpop.f32.mrb[0].mxu0
  %184 = vmatprep.mubr.f32.mxu0 0.0
  %185 = vmatmul.mubr.f32.gmra.mrb[0].mxu0 %v80
  %v186 = vpop.f32.mrb[0].mxu0
  %v187 = vadd.f32 0.0, %v186
  %v188 = vpop.f32.mrb[0].mxu0
  %189 = vmatprep.mubr.f32.mxu0 0.0
  %190 = vmatmul.mubr.f32.gmra.mrb[0].mxu0 %v81
  %v191 = vpop.f32.mrb[0].mxu0
  %v192 = vadd.f32 0.0, %v191
  %v193 = vpop.f32.mrb[0].mxu0
  %194 = vmatprep.mubr.f32.mxu0 0.0
  %195 = vmatmul.mubr.f32.gmra.mrb[0].mxu0 %v82
  %v196 = vpop.f32.mrb[0].mxu0
  %v197 = vadd.f32 0.0, %v196
  %v198 = vpop.f32.mrb[0].mxu0
  %199 = vmatprep.mubr.f32.mxu0 0.0
  %200 = vmatmul.mubr.f32.gmra.mrb[0].mxu0 %v83
  %v201 = vpop.f32.mrb[0].mxu0
  %v202 = vadd.f32 0.0, %v201
  %v203 = vpop.f32.mrb[0].mxu0
  %204 = vdwg.mxu0
  %v205 = vld [vmem:[%s2] sm:$0xff]
  %v206 = vld [vmem:[%s2 + $0x8] sm:$0xff]
  %v207 = vld [vmem:[%s2 + $0x10] sm:$0xff]
  %v208 = vld [vmem:[%s2 + $0x18] sm:$0xff]
  %v209 = vld [vmem:[%s4] sm:$0x1]
  %v211 = vlaneseq
  %v212 = vshrl.u32 %v211, 7
  %v213 = vsub.s32 0, %v212
  %v214 = vrot.slane %v209, %v213
  %vm216 = vcmask 261120
  %v218 = vsel %vm216, %v167, 0
  %v221 = vsel %vm216, %v172, 0
  %v224 = vsel %vm216, %v177, 0
  %v227 = vsel %vm216, %v182, 0
  %v230 = vsel %vm216, %v187, 0
  %v233 = vsel %vm216, %v192, 0
  %v236 = vsel %vm216, %v197, 0
  %v239 = vsel %vm216, %v202, 0
  %241 = vmatprep.subr.mxu0 0.0
  %242 = vmatpush1.msra.mxu0 %v205
  %243 = vmatprep.subr.mxu0 0.0
  %244 = vmatpush1.msra.mxu0 %v206
  %245 = vmatprep.subr.mxu0 0.0
  %246 = vmatpush1.msra.mxu0 %v207
  %247 = vmatprep.subr.mxu0 0.0
  %248 = vmatpush1.msra.mxu0 %v208
  %249 = vmatprep.subr.mxu0 0.0
  %250 = vmatpush1.msra.mxu0 0.0
  %251 = vmatprep.subr.mxu0 0.0
  %252 = vmatpush1.msra.mxu0 0.0
  %253 = vmatprep.subr.mxu0 0.0
  %254 = vmatpush1.msra.mxu0 0.0
  %255 = vmatprep.subr.mxu0 0.0
  %256 = vmatpush1.msra.mxu0 0.0
  %257 = vmatprep.subr.mxu0 0.0
  %258 = vmatpush1.msra.mxu0 0.0
  %259 = vmatprep.subr.mxu0 0.0
  %260 = vmatpush1.msra.mxu0 0.0
  %261 = vmatprep.subr.mxu0 0.0
  %262 = vmatpush1.msra.mxu0 0.0
  %263 = vmatprep.subr.mxu0 0.0
  %264 = vmatpush1.msra.mxu0 0.0
  %265 = vmatprep.subr.mxu0 0.0
  %266 = vmatpush1.msra.mxu0 0.0
  %267 = vmatprep.subr.mxu0 0.0
  %268 = vmatpush1.msra.mxu0 0.0
  %269 = vmatprep.subr.mxu0 0.0
  %270 = vmatpush1.msra.mxu0 0.0
  %271 = vmatprep.subr.mxu0 0.0
  %272 = vmatpush1.msra.mxu0 0.0
  %273 = vmatprep.subr.mxu0 0.0
  %274 = vmatpush1.msra.mxu0 0.0
  %275 = vmatprep.subr.mxu0 0.0
  %276 = vmatpush1.msra.mxu0 0.0
  %277 = vmatprep.subr.mxu0 0.0
  %278 = vmatpush1.msra.mxu0 0.0
  %279 = vmatprep.subr.mxu0 0.0
  %280 = vmatpush1.msra.mxu0 0.0
  %281 = vmatprep.subr.mxu0 0.0
  %282 = vmatpush1.msra.mxu0 0.0
  %283 = vmatprep.subr.mxu0 0.0
  %284 = vmatpush1.msra.mxu0 0.0
  %285 = vmatprep.subr.mxu0 0.0
  %286 = vmatpush1.msra.mxu0 0.0
  %287 = vmatprep.subr.mxu0 0.0
  %288 = vmatpush1.msra.mxu0 0.0
  %289 = vmatprep.subr.mxu0 0.0
  %290 = vmatpush1.msra.mxu0 0.0
  %291 = vmatprep.subr.mxu0 0.0
  %292 = vmatpush1.msra.mxu0 0.0
  %293 = vmatprep.subr.mxu0 0.0
  %294 = vmatpush1.msra.mxu0 0.0
  %295 = vmatprep.subr.mxu0 0.0
  %296 = vmatpush1.msra.mxu0 0.0
  %297 = vmatprep.subr.mxu0 0.0
  %298 = vmatpush1.msra.mxu0 0.0
  %299 = vmatprep.subr.mxu0 0.0
  %300 = vmatpush1.msra.mxu0 0.0
  %301 = vmatprep.subr.mxu0 0.0
  %302 = vmatpush1.msra.mxu0 0.0
  %303 = vmatprep.subr.mxu0 0.0
  %304 = vmatpush1.msra.mxu0 0.0
  %305 = vmatprep.mubr.f32.mxu0 0.0
  %306 = vmatmul.mubr.f32.gmra.mrb[0].mxu0 %v218
  %v307 = vpop.f32.mrb[0].mxu0
  %v308 = vadd.f32 %v214, %v307
  %v309 = vpop.f32.mrb[0].mxu0
  %310 = vmatprep.mubr.f32.mxu0 0.0
  %311 = vmatmul.mubr.f32.gmra.mrb[0].mxu0 %v221
  %v312 = vpop.f32.mrb[0].mxu0
  %v313 = vadd.f32 %v214, %v312
  %v314 = vpop.f32.mrb[0].mxu0
  %315 = vmatprep.mubr.f32.mxu0 0.0
  %316 = vmatmul.mubr.f32.gmra.mrb[0].mxu0 %v224
  %v317 = vpop.f32.mrb[0].mxu0
  %v318 = vadd.f32 %v214, %v317
  %v319 = vpop.f32.mrb[0].mxu0
  %320 = vmatprep.mubr.f32.mxu0 0.0
  %321 = vmatmul.mubr.f32.gmra.mrb[0].mxu0 %v227
  %v322 = vpop.f32.mrb[0].mxu0
  %v323 = vadd.f32 %v214, %v322
  %v324 = vpop.f32.mrb[0].mxu0
  %325 = vmatprep.mubr.f32.mxu0 0.0
  %326 = vmatmul.mubr.f32.gmra.mrb[0].mxu0 %v230
  %v327 = vpop.f32.mrb[0].mxu0
  %v328 = vadd.f32 %v214, %v327
  %v329 = vpop.f32.mrb[0].mxu0
  %330 = vmatprep.mubr.f32.mxu0 0.0
  %331 = vmatmul.mubr.f32.gmra.mrb[0].mxu0 %v233
  %v332 = vpop.f32.mrb[0].mxu0
  %v333 = vadd.f32 %v214, %v332
  %v334 = vpop.f32.mrb[0].mxu0
  %335 = vmatprep.mubr.f32.mxu0 0.0
  %336 = vmatmul.mubr.f32.gmra.mrb[0].mxu0 %v236
  %v337 = vpop.f32.mrb[0].mxu0
  %v338 = vadd.f32 %v214, %v337
  %v339 = vpop.f32.mrb[0].mxu0
  %340 = vmatprep.mubr.f32.mxu0 0.0
  %341 = vmatmul.mubr.f32.gmra.mrb[0].mxu0 %v239
  %v342 = vpop.f32.mrb[0].mxu0
  %v343 = vadd.f32 %v214, %v342
  %v344 = vpop.f32.mrb[0].mxu0
  %345 = vdwg.mxu0
  %346 = vst [vmem:[#allocation2] sm:$0xff] %v308
  %347 = vst [vmem:[#allocation2 + $0x8] sm:$0xff] %v313
  %348 = vst [vmem:[#allocation2 + $0x10] sm:$0xff] %v318
  %349 = vst [vmem:[#allocation2 + $0x18] sm:$0xff] %v323
  %350 = vst [vmem:[#allocation2 + $0x20] sm:$0xff] %v328
  %351 = vst [vmem:[#allocation2 + $0x28] sm:$0xff] %v333
  %352 = vst [vmem:[#allocation2 + $0x30] sm:$0xff] %v338
  %353 = vst [vmem:[#allocation2 + $0x38] sm:$0xff] %v343
  %v354 = vld [vmem:[%s3] sm:$0xff]
  %v355 = vld [vmem:[%s3 + $0x8] sm:$0xff]
  %v356 = vld [vmem:[%s3 + $0x10] sm:$0xff]
  %v357 = vld [vmem:[%s3 + $0x18] sm:$0xff]
  %v358 = vld [vmem:[#allocation2] sm:$0xff]
  %v360 = vsel %vm216, 0.0, 0
  %362 = vmatprep.subr.mxu0 0.0
  %363 = vmatpush1.msra.mxu0 %v354
  %364 = vmatprep.subr.mxu0 0.0
  %365 = vmatpush1.msra.mxu0 %v355
  %366 = vmatprep.subr.mxu0 0.0
  %367 = vmatpush1.msra.mxu0 %v356
  %368 = vmatprep.subr.mxu0 0.0
  %369 = vmatpush1.msra.mxu0 %v357
  %370 = vmatprep.subr.mxu0 0.0
  %371 = vmatpush1.msra.mxu0 0.0
  %372 = vmatprep.subr.mxu0 0.0
  %373 = vmatpush1.msra.mxu0 0.0
  %374 = vmatprep.subr.mxu0 0.0
  %375 = vmatpush1.msra.mxu0 0.0
  %376 = vmatprep.subr.mxu0 0.0
  %377 = vmatpush1.msra.mxu0 0.0
  %378 = vmatprep.subr.mxu0 0.0
  %379 = vmatpush1.msra.mxu0 0.0
  %380 = vmatprep.subr.mxu0 0.0
  %381 = vmatpush1.msra.mxu0 0.0
  %382 = vmatprep.subr.mxu0 0.0
  %383 = vmatpush1.msra.mxu0 0.0
  %384 = vmatprep.subr.mxu0 0.0
  %385 = vmatpush1.msra.mxu0 0.0
  %386 = vmatprep.subr.mxu0 0.0
  %387 = vmatpush1.msra.mxu0 0.0
  %388 = vmatprep.subr.mxu0 0.0
  %389 = vmatpush1.msra.mxu0 0.0
  %390 = vmatprep.subr.mxu0 0.0
  %391 = vmatpush1.msra.mxu0 0.0
  %392 = vmatprep.subr.mxu0 0.0
  %393 = vmatpush1.msra.mxu0 0.0
  %394 = vmatprep.subr.mxu0 0.0
  %395 = vmatpush1.msra.mxu0 0.0
  %396 = vmatprep.subr.mxu0 0.0
  %397 = vmatpush1.msra.mxu0 0.0
  %398 = vmatprep.subr.mxu0 0.0
  %399 = vmatpush1.msra.mxu0 0.0
  %400 = vmatprep.subr.mxu0 0.0
  %401 = vmatpush1.msra.mxu0 0.0
  %402 = vmatprep.subr.mxu0 0.0
  %403 = vmatpush1.msra.mxu0 0.0
  %404 = vmatprep.subr.mxu0 0.0
  %405 = vmatpush1.msra.mxu0 0.0
  %406 = vmatprep.subr.mxu0 0.0
  %407 = vmatpush1.msra.mxu0 0.0
  %408 = vmatprep.subr.mxu0 0.0
  %409 = vmatpush1.msra.mxu0 0.0
  %410 = vmatprep.subr.mxu0 0.0
  %411 = vmatpush1.msra.mxu0 0.0
  %412 = vmatprep.subr.mxu0 0.0
  %413 = vmatpush1.msra.mxu0 0.0
  %414 = vmatprep.subr.mxu0 0.0
  %415 = vmatpush1.msra.mxu0 0.0
  %416 = vmatprep.subr.mxu0 0.0
  %417 = vmatpush1.msra.mxu0 0.0
  %418 = vmatprep.subr.mxu0 0.0
  %419 = vmatpush1.msra.mxu0 0.0
  %420 = vmatprep.subr.mxu0 0.0
  %421 = vmatpush1.msra.mxu0 0.0
  %422 = vmatprep.subr.mxu0 0.0
  %423 = vmatpush1.msra.mxu0 0.0
  %424 = vmatprep.subr.mxu0 0.0
  %425 = vmatpush1.msra.mxu0 0.0
  %426 = vmatprep.mubr.f32.mxu0 0.0
  %427 = vmatmul.mubr.f32.gmra.mrb[0].mxu0 %v360
  %v428 = vpop.f32.mrb[0].mxu0
  %v429 = vadd.f32 0.0, %v428
  %v430 = vpop.f32.mrb[0].mxu0
  %431 = vdwg.mxu0
  %v432 = vadd.f32 %v358, %v429
  %v433 = vxor.u32 %v432, 2147483648
  %v434 = vmul.f32 %v433, 1.442695
  %v435 = vpow.pop %v434
  %v436 = vadd.f32 %v435, 1.0
  %v437 = vrcp.pop %v436
  %v438 = vmul.f32 1.0, %v437
  %v439 = vtanh.pop %v432
  %v440 = vmul.f32 %v438, 0.0
  %442 = vrot.lane.b32.xlu0 %v439, 64
  %v443 = vpop.permute.xlu0 %442
  %v445 = vmul.f32 %v438, %v443
  %447 = vrot.lane.b32.xlu0 %v445, 32
  %v448 = vpop.permute.xlu0 %447
  %v450 = vadd.f32 %v440, %v448
  %v451 = vtanh.pop %v450
  %453 = vrot.lane.b32.xlu0 %v451, 64
  %v454 = vpop.permute.xlu0 %453
  %v456 = vmul.f32 %v438, %v454
  %s457 = scalar_lea.vmem [#allocation2], 8
  %v458 = vld [vmem:[%s457] sm:$0xff]
  %460 = vrot.lane.b32.xlu0 %v456, 32
  %v461 = vpop.permute.xlu0 %460
  %v462 = vsel %vm216, %v461, 0
  %464 = vmatprep.subr.mxu0 0.0
  %465 = vmatpush1.msra.mxu0 %v354
  %466 = vmatprep.subr.mxu0 0.0
  %467 = vmatpush1.msra.mxu0 %v355
  %468 = vmatprep.subr.mxu0 0.0
  %469 = vmatpush1.msra.mxu0 %v356
  %470 = vmatprep.subr.mxu0 0.0
  %471 = vmatpush1.msra.mxu0 %v357
  %472 = vmatprep.subr.mxu0 0.0
  %473 = vmatpush1.msra.mxu0 0.0
  %474 = vmatprep.subr.mxu0 0.0
  %475 = vmatpush1.msra.mxu0 0.0
  %476 = vmatprep.subr.mxu0 0.0
  %477 = vmatpush1.msra.mxu0 0.0
  %478 = vmatprep.subr.mxu0 0.0
  %479 = vmatpush1.msra.mxu0 0.0
  %480 = vmatprep.subr.mxu0 0.0
  %481 = vmatpush1.msra.mxu0 0.0
  %482 = vmatprep.subr.mxu0 0.0
  %483 = vmatpush1.msra.mxu0 0.0
  %484 = vmatprep.subr.mxu0 0.0
  %485 = vmatpush1.msra.mxu0 0.0
  %486 = vmatprep.subr.mxu0 0.0
  %487 = vmatpush1.msra.mxu0 0.0
  %488 = vmatprep.subr.mxu0 0.0
  %489 = vmatpush1.msra.mxu0 0.0
  %490 = vmatprep.subr.mxu0 0.0
  %491 = vmatpush1.msra.mxu0 0.0
  %492 = vmatprep.subr.mxu0 0.0
  %493 = vmatpush1.msra.mxu0 0.0
  %494 = vmatprep.subr.mxu0 0.0
  %495 = vmatpush1.msra.mxu0 0.0
  %496 = vmatprep.subr.mxu0 0.0
  %497 = vmatpush1.msra.mxu0 0.0
  %498 = vmatprep.subr.mxu0 0.0
  %499 = vmatpush1.msra.mxu0 0.0
  %500 = vmatprep.subr.mxu0 0.0
  %501 = vmatpush1.msra.mxu0 0.0
  %502 = vmatprep.subr.mxu0 0.0
  %503 = vmatpush1.msra.mxu0 0.0
  %504 = vmatprep.subr.mxu0 0.0
  %505 = vmatpush1.msra.mxu0 0.0
  %506 = vmatprep.subr.mxu0 0.0
  %507 = vmatpush1.msra.mxu0 0.0
  %508 = vmatprep.subr.mxu0 0.0
  %509 = vmatpush1.msra.mxu0 0.0
  %510 = vmatprep.subr.mxu0 0.0
  %511 = vmatpush1.msra.mxu0 0.0
  %512 = vmatprep.subr.mxu0 0.0
  %513 = vmatpush1.msra.mxu0 0.0
  %514 = vmatprep.subr.mxu0 0.0
  %515 = vmatpush1.msra.mxu0 0.0
  %516 = vmatprep.subr.mxu0 0.0
  %517 = vmatpush1.msra.mxu0 0.0
  %518 = vmatprep.subr.mxu0 0.0
  %519 = vmatpush1.msra.mxu0 0.0
  %520 = vmatprep.subr.mxu0 0.0
  %521 = vmatpush1.msra.mxu0 0.0
  %522 = vmatprep.subr.mxu0 0.0
  %523 = vmatpush1.msra.mxu0 0.0
  %524 = vmatprep.subr.mxu0 0.0
  %525 = vmatpush1.msra.mxu0 0.0
  %526 = vmatprep.subr.mxu0 0.0
  %527 = vmatpush1.msra.mxu0 0.0
  %528 = vmatprep.mubr.f32.mxu0 0.0
  %529 = vmatmul.mubr.f32.gmra.mrb[0].mxu0 %v462
  %v530 = vpop.f32.mrb[0].mxu0
  %v531 = vadd.f32 0.0, %v530
  %v532 = vpop.f32.mrb[0].mxu0
  %533 = vdwg.mxu0
  %v534 = vadd.f32 %v458, %v531
  %v535 = vxor.u32 %v534, 2147483648
  %v536 = vmul.f32 %v535, 1.442695
  %v537 = vpow.pop %v536
  %v538 = vadd.f32 %v537, 1.0
  %v539 = vrcp.pop %v538
  %v540 = vmul.f32 1.0, %v539
  %v541 = vtanh.pop %v534
  %v542 = vmul.f32 %v540, %v450
  %544 = vrot.lane.b32.xlu0 %v541, 64
  %v545 = vpop.permute.xlu0 %544
  %v547 = vmul.f32 %v540, %v545
  %549 = vrot.lane.b32.xlu0 %v547, 32
  %v550 = vpop.permute.xlu0 %549
  %v552 = vadd.f32 %v542, %v550
  %v553 = vtanh.pop %v552
  %555 = vrot.lane.b32.xlu0 %v553, 64
  %v556 = vpop.permute.xlu0 %555
  %v558 = vmul.f32 %v540, %v556
  %s559 = scalar_lea.vmem [#allocation2], 16
  %v560 = vld [vmem:[%s559] sm:$0xff]
  %562 = vrot.lane.b32.xlu0 %v558, 32
  %v563 = vpop.permute.xlu0 %562
  %v564 = vsel %vm216, %v563, 0
  %566 = vmatprep.subr.mxu0 0.0
  %567 = vmatpush1.msra.mxu0 %v354
  %568 = vmatprep.subr.mxu0 0.0
  %569 = vmatpush1.msra.mxu0 %v355
  %570 = vmatprep.subr.mxu0 0.0
  %571 = vmatpush1.msra.mxu0 %v356
  %572 = vmatprep.subr.mxu0 0.0
  %573 = vmatpush1.msra.mxu0 %v357
  %574 = vmatprep.subr.mxu0 0.0
  %575 = vmatpush1.msra.mxu0 0.0
  %576 = vmatprep.subr.mxu0 0.0
  %577 = vmatpush1.msra.mxu0 0.0
  %578 = vmatprep.subr.mxu0 0.0
  %579 = vmatpush1.msra.mxu0 0.0
  %580 = vmatprep.subr.mxu0 0.0
  %581 = vmatpush1.msra.mxu0 0.0
  %582 = vmatprep.subr.mxu0 0.0
  %583 = vmatpush1.msra.mxu0 0.0
  %584 = vmatprep.subr.mxu0 0.0
  %585 = vmatpush1.msra.mxu0 0.0
  %586 = vmatprep.subr.mxu0 0.0
  %587 = vmatpush1.msra.mxu0 0.0
  %588 = vmatprep.subr.mxu0 0.0
  %589 = vmatpush1.msra.mxu0 0.0
  %590 = vmatprep.subr.mxu0 0.0
  %591 = vmatpush1.msra.mxu0 0.0
  %592 = vmatprep.subr.mxu0 0.0
  %593 = vmatpush1.msra.mxu0 0.0
  %594 = vmatprep.subr.mxu0 0.0
  %595 = vmatpush1.msra.mxu0 0.0
  %596 = vmatprep.subr.mxu0 0.0
  %597 = vmatpush1.msra.mxu0 0.0
  %598 = vmatprep.subr.mxu0 0.0
  %599 = vmatpush1.msra.mxu0 0.0
  %600 = vmatprep.subr.mxu0 0.0
  %601 = vmatpush1.msra.mxu0 0.0
  %602 = vmatprep.subr.mxu0 0.0
  %603 = vmatpush1.msra.mxu0 0.0
  %604 = vmatprep.subr.mxu0 0.0
  %605 = vmatpush1.msra.mxu0 0.0
  %606 = vmatprep.subr.mxu0 0.0
  %607 = vmatpush1.msra.mxu0 0.0
  %608 = vmatprep.subr.mxu0 0.0
  %609 = vmatpush1.msra.mxu0 0.0
  %610 = vmatprep.subr.mxu0 0.0
  %611 = vmatpush1.msra.mxu0 0.0
  %612 = vmatprep.subr.mxu0 0.0
  %613 = vmatpush1.msra.mxu0 0.0
  %614 = vmatprep.subr.mxu0 0.0
  %615 = vmatpush1.msra.mxu0 0.0
  %616 = vmatprep.subr.mxu0 0.0
  %617 = vmatpush1.msra.mxu0 0.0
  %618 = vmatprep.subr.mxu0 0.0
  %619 = vmatpush1.msra.mxu0 0.0
  %620 = vmatprep.subr.mxu0 0.0
  %621 = vmatpush1.msra.mxu0 0.0
  %622 = vmatprep.subr.mxu0 0.0
  %623 = vmatpush1.msra.mxu0 0.0
  %624 = vmatprep.subr.mxu0 0.0
  %625 = vmatpush1.msra.mxu0 0.0
  %626 = vmatprep.subr.mxu0 0.0
  %627 = vmatpush1.msra.mxu0 0.0
  %628 = vmatprep.subr.mxu0 0.0
  %629 = vmatpush1.msra.mxu0 0.0
  %630 = vmatprep.mubr.f32.mxu0 0.0
  %631 = vmatmul.mubr.f32.gmra.mrb[0].mxu0 %v564
  %v632 = vpop.f32.mrb[0].mxu0
  %v633 = vadd.f32 0.0, %v632
  %v634 = vpop.f32.mrb[0].mxu0
  %635 = vdwg.mxu0
  %v636 = vadd.f32 %v560, %v633
  %v637 = vxor.u32 %v636, 2147483648
  %v638 = vmul.f32 %v637, 1.442695
  %v639 = vpow.pop %v638
  %v640 = vadd.f32 %v639, 1.0
  %v641 = vrcp.pop %v640
  %v642 = vmul.f32 1.0, %v641
  %v643 = vtanh.pop %v636
  %v644 = vmul.f32 %v642, %v552
  %646 = vrot.lane.b32.xlu0 %v643, 64
  %v647 = vpop.permute.xlu0 %646
  %v649 = vmul.f32 %v642, %v647
  %651 = vrot.lane.b32.xlu0 %v649, 32
  %v652 = vpop.permute.xlu0 %651
  %v654 = vadd.f32 %v644, %v652
  %v655 = vtanh.pop %v654
  %657 = vrot.lane.b32.xlu0 %v655, 64
  %v658 = vpop.permute.xlu0 %657
  %v660 = vmul.f32 %v642, %v658
  %s661 = scalar_lea.vmem [#allocation2], 24
  %v662 = vld [vmem:[%s661] sm:$0xff]
  %664 = vrot.lane.b32.xlu0 %v660, 32
  %v665 = vpop.permute.xlu0 %664
  %v666 = vsel %vm216, %v665, 0
  %668 = vmatprep.subr.mxu0 0.0
  %669 = vmatpush1.msra.mxu0 %v354
  %670 = vmatprep.subr.mxu0 0.0
  %671 = vmatpush1.msra.mxu0 %v355
  %672 = vmatprep.subr.mxu0 0.0
  %673 = vmatpush1.msra.mxu0 %v356
  %674 = vmatprep.subr.mxu0 0.0
  %675 = vmatpush1.msra.mxu0 %v357
  %676 = vmatprep.subr.mxu0 0.0
  %677 = vmatpush1.msra.mxu0 0.0
  %678 = vmatprep.subr.mxu0 0.0
  %679 = vmatpush1.msra.mxu0 0.0
  %680 = vmatprep.subr.mxu0 0.0
  %681 = vmatpush1.msra.mxu0 0.0
  %682 = vmatprep.subr.mxu0 0.0
  %683 = vmatpush1.msra.mxu0 0.0
  %684 = vmatprep.subr.mxu0 0.0
  %685 = vmatpush1.msra.mxu0 0.0
  %686 = vmatprep.subr.mxu0 0.0
  %687 = vmatpush1.msra.mxu0 0.0
  %688 = vmatprep.subr.mxu0 0.0
  %689 = vmatpush1.msra.mxu0 0.0
  %690 = vmatprep.subr.mxu0 0.0
  %691 = vmatpush1.msra.mxu0 0.0
  %692 = vmatprep.subr.mxu0 0.0
  %693 = vmatpush1.msra.mxu0 0.0
  %694 = vmatprep.subr.mxu0 0.0
  %695 = vmatpush1.msra.mxu0 0.0
  %696 = vmatprep.subr.mxu0 0.0
  %697 = vmatpush1.msra.mxu0 0.0
  %698 = vmatprep.subr.mxu0 0.0
  %699 = vmatpush1.msra.mxu0 0.0
  %700 = vmatprep.subr.mxu0 0.0
  %701 = vmatpush1.msra.mxu0 0.0
  %702 = vmatprep.subr.mxu0 0.0
  %703 = vmatpush1.msra.mxu0 0.0
  %704 = vmatprep.subr.mxu0 0.0
  %705 = vmatpush1.msra.mxu0 0.0
  %706 = vmatprep.subr.mxu0 0.0
  %707 = vmatpush1.msra.mxu0 0.0
  %708 = vmatprep.subr.mxu0 0.0
  %709 = vmatpush1.msra.mxu0 0.0
  %710 = vmatprep.subr.mxu0 0.0
  %711 = vmatpush1.msra.mxu0 0.0
  %712 = vmatprep.subr.mxu0 0.0
  %713 = vmatpush1.msra.mxu0 0.0
  %714 = vmatprep.subr.mxu0 0.0
  %715 = vmatpush1.msra.mxu0 0.0
  %716 = vmatprep.subr.mxu0 0.0
  %717 = vmatpush1.msra.mxu0 0.0
  %718 = vmatprep.subr.mxu0 0.0
  %719 = vmatpush1.msra.mxu0 0.0
  %720 = vmatprep.subr.mxu0 0.0
  %721 = vmatpush1.msra.mxu0 0.0
  %722 = vmatprep.subr.mxu0 0.0
  %723 = vmatpush1.msra.mxu0 0.0
  %724 = vmatprep.subr.mxu0 0.0
  %725 = vmatpush1.msra.mxu0 0.0
  %726 = vmatprep.subr.mxu0 0.0
  %727 = vmatpush1.msra.mxu0 0.0
  %728 = vmatprep.subr.mxu0 0.0
  %729 = vmatpush1.msra.mxu0 0.0
  %730 = vmatprep.subr.mxu0 0.0
  %731 = vmatpush1.msra.mxu0 0.0
  %732 = vmatprep.mubr.f32.mxu0 0.0
  %733 = vmatmul.mubr.f32.gmra.mrb[0].mxu0 %v666
  %v734 = vpop.f32.mrb[0].mxu0
  %v735 = vadd.f32 0.0, %v734
  %v736 = vpop.f32.mrb[0].mxu0
  %737 = vdwg.mxu0
  %v738 = vadd.f32 %v662, %v735
  %v739 = vxor.u32 %v738, 2147483648
  %v740 = vmul.f32 %v739, 1.442695
  %v741 = vpow.pop %v740
  %v742 = vadd.f32 %v741, 1.0
  %v743 = vrcp.pop %v742
  %v744 = vmul.f32 1.0, %v743
  %v745 = vtanh.pop %v738
  %v746 = vmul.f32 %v744, %v654
  %748 = vrot.lane.b32.xlu0 %v745, 64
  %v749 = vpop.permute.xlu0 %748
  %v751 = vmul.f32 %v744, %v749
  %753 = vrot.lane.b32.xlu0 %v751, 32
  %v754 = vpop.permute.xlu0 %753
  %v756 = vadd.f32 %v746, %v754
  %v757 = vtanh.pop %v756
  %759 = vrot.lane.b32.xlu0 %v757, 64
  %v760 = vpop.permute.xlu0 %759
  %v762 = vmul.f32 %v744, %v760
  %s763 = scalar_lea.vmem [#allocation2], 32
  %v764 = vld [vmem:[%s763] sm:$0xff]
  %766 = vrot.lane.b32.xlu0 %v762, 32
  %v767 = vpop.permute.xlu0 %766
  %v768 = vsel %vm216, %v767, 0
  %770 = vmatprep.subr.mxu0 0.0
  %771 = vmatpush1.msra.mxu0 %v354
  %772 = vmatprep.subr.mxu0 0.0
  %773 = vmatpush1.msra.mxu0 %v355
  %774 = vmatprep.subr.mxu0 0.0
  %775 = vmatpush1.msra.mxu0 %v356
  %776 = vmatprep.subr.mxu0 0.0
  %777 = vmatpush1.msra.mxu0 %v357
  %778 = vmatprep.subr.mxu0 0.0
  %779 = vmatpush1.msra.mxu0 0.0
  %780 = vmatprep.subr.mxu0 0.0
  %781 = vmatpush1.msra.mxu0 0.0
  %782 = vmatprep.subr.mxu0 0.0
  %783 = vmatpush1.msra.mxu0 0.0
  %784 = vmatprep.subr.mxu0 0.0
  %785 = vmatpush1.msra.mxu0 0.0
  %786 = vmatprep.subr.mxu0 0.0
  %787 = vmatpush1.msra.mxu0 0.0
  %788 = vmatprep.subr.mxu0 0.0
  %789 = vmatpush1.msra.mxu0 0.0
  %790 = vmatprep.subr.mxu0 0.0
  %791 = vmatpush1.msra.mxu0 0.0
  %792 = vmatprep.subr.mxu0 0.0
  %793 = vmatpush1.msra.mxu0 0.0
  %794 = vmatprep.subr.mxu0 0.0
  %795 = vmatpush1.msra.mxu0 0.0
  %796 = vmatprep.subr.mxu0 0.0
  %797 = vmatpush1.msra.mxu0 0.0
  %798 = vmatprep.subr.mxu0 0.0
  %799 = vmatpush1.msra.mxu0 0.0
  %800 = vmatprep.subr.mxu0 0.0
  %801 = vmatpush1.msra.mxu0 0.0
  %802 = vmatprep.subr.mxu0 0.0
  %803 = vmatpush1.msra.mxu0 0.0
  %804 = vmatprep.subr.mxu0 0.0
  %805 = vmatpush1.msra.mxu0 0.0
  %806 = vmatprep.subr.mxu0 0.0
  %807 = vmatpush1.msra.mxu0 0.0
  %808 = vmatprep.subr.mxu0 0.0
  %809 = vmatpush1.msra.mxu0 0.0
  %810 = vmatprep.subr.mxu0 0.0
  %811 = vmatpush1.msra.mxu0 0.0
  %812 = vmatprep.subr.mxu0 0.0
  %813 = vmatpush1.msra.mxu0 0.0
  %814 = vmatprep.subr.mxu0 0.0
  %815 = vmatpush1.msra.mxu0 0.0
  %816 = vmatprep.subr.mxu0 0.0
  %817 = vmatpush1.msra.mxu0 0.0
  %818 = vmatprep.subr.mxu0 0.0
  %819 = vmatpush1.msra.mxu0 0.0
  %820 = vmatprep.subr.mxu0 0.0
  %821 = vmatpush1.msra.mxu0 0.0
  %822 = vmatprep.subr.mxu0 0.0
  %823 = vmatpush1.msra.mxu0 0.0
  %824 = vmatprep.subr.mxu0 0.0
  %825 = vmatpush1.msra.mxu0 0.0
  %826 = vmatprep.subr.mxu0 0.0
  %827 = vmatpush1.msra.mxu0 0.0
  %828 = vmatprep.subr.mxu0 0.0
  %829 = vmatpush1.msra.mxu0 0.0
  %830 = vmatprep.subr.mxu0 0.0
  %831 = vmatpush1.msra.mxu0 0.0
  %832 = vmatprep.subr.mxu0 0.0
  %833 = vmatpush1.msra.mxu0 0.0
  %834 = vmatprep.mubr.f32.mxu0 0.0
  %835 = vmatmul.mubr.f32.gmra.mrb[0].mxu0 %v768
  %v836 = vpop.f32.mrb[0].mxu0
  %v837 = vadd.f32 0.0, %v836
  %v838 = vpop.f32.mrb[0].mxu0
  %839 = vdwg.mxu0
  %v840 = vadd.f32 %v764, %v837
  %v841 = vxor.u32 %v840, 2147483648
  %v842 = vmul.f32 %v841, 1.442695
  %v843 = vpow.pop %v842
  %v844 = vadd.f32 %v843, 1.0
  %v845 = vrcp.pop %v844
  %v846 = vmul.f32 1.0, %v845
  %v847 = vtanh.pop %v840
  %v848 = vmul.f32 %v846, %v756
  %850 = vrot.lane.b32.xlu0 %v847, 64
  %v851 = vpop.permute.xlu0 %850
  %v853 = vmul.f32 %v846, %v851
  %855 = vrot.lane.b32.xlu0 %v853, 32
  %v856 = vpop.permute.xlu0 %855
  %v858 = vadd.f32 %v848, %v856
  %v859 = vtanh.pop %v858
  %861 = vrot.lane.b32.xlu0 %v859, 64
  %v862 = vpop.permute.xlu0 %861
  %v864 = vmul.f32 %v846, %v862
  %s865 = scalar_lea.vmem [#allocation2], 40
  %v866 = vld [vmem:[%s865] sm:$0xff]
  %868 = vrot.lane.b32.xlu0 %v864, 32
  %v869 = vpop.permute.xlu0 %868
  %v870 = vsel %vm216, %v869, 0
  %872 = vmatprep.subr.mxu0 0.0
  %873 = vmatpush1.msra.mxu0 %v354
  %874 = vmatprep.subr.mxu0 0.0
  %875 = vmatpush1.msra.mxu0 %v355
  %876 = vmatprep.subr.mxu0 0.0
  %877 = vmatpush1.msra.mxu0 %v356
  %878 = vmatprep.subr.mxu0 0.0
  %879 = vmatpush1.msra.mxu0 %v357
  %880 = vmatprep.subr.mxu0 0.0
  %881 = vmatpush1.msra.mxu0 0.0
  %882 = vmatprep.subr.mxu0 0.0
  %883 = vmatpush1.msra.mxu0 0.0
  %884 = vmatprep.subr.mxu0 0.0
  %885 = vmatpush1.msra.mxu0 0.0
  %886 = vmatprep.subr.mxu0 0.0
  %887 = vmatpush1.msra.mxu0 0.0
  %888 = vmatprep.subr.mxu0 0.0
  %889 = vmatpush1.msra.mxu0 0.0
  %890 = vmatprep.subr.mxu0 0.0
  %891 = vmatpush1.msra.mxu0 0.0
  %892 = vmatprep.subr.mxu0 0.0
  %893 = vmatpush1.msra.mxu0 0.0
  %894 = vmatprep.subr.mxu0 0.0
  %895 = vmatpush1.msra.mxu0 0.0
  %896 = vmatprep.subr.mxu0 0.0
  %897 = vmatpush1.msra.mxu0 0.0
  %898 = vmatprep.subr.mxu0 0.0
  %899 = vmatpush1.msra.mxu0 0.0
  %900 = vmatprep.subr.mxu0 0.0
  %901 = vmatpush1.msra.mxu0 0.0
  %902 = vmatprep.subr.mxu0 0.0
  %903 = vmatpush1.msra.mxu0 0.0
  %904 = vmatprep.subr.mxu0 0.0
  %905 = vmatpush1.msra.mxu0 0.0
  %906 = vmatprep.subr.mxu0 0.0
  %907 = vmatpush1.msra.mxu0 0.0
  %908 = vmatprep.subr.mxu0 0.0
  %909 = vmatpush1.msra.mxu0 0.0
  %910 = vmatprep.subr.mxu0 0.0
  %911 = vmatpush1.msra.mxu0 0.0
  %912 = vmatprep.subr.mxu0 0.0
  %913 = vmatpush1.msra.mxu0 0.0
  %914 = vmatprep.subr.mxu0 0.0
  %915 = vmatpush1.msra.mxu0 0.0
  %916 = vmatprep.subr.mxu0 0.0
  %917 = vmatpush1.msra.mxu0 0.0
  %918 = vmatprep.subr.mxu0 0.0
  %919 = vmatpush1.msra.mxu0 0.0
  %920 = vmatprep.subr.mxu0 0.0
  %921 = vmatpush1.msra.mxu0 0.0
  %922 = vmatprep.subr.mxu0 0.0
  %923 = vmatpush1.msra.mxu0 0.0
  %924 = vmatprep.subr.mxu0 0.0
  %925 = vmatpush1.msra.mxu0 0.0
  %926 = vmatprep.subr.mxu0 0.0
  %927 = vmatpush1.msra.mxu0 0.0
  %928 = vmatprep.subr.mxu0 0.0
  %929 = vmatpush1.msra.mxu0 0.0
  %930 = vmatprep.subr.mxu0 0.0
  %931 = vmatpush1.msra.mxu0 0.0
  %932 = vmatprep.subr.mxu0 0.0
  %933 = vmatpush1.msra.mxu0 0.0
  %934 = vmatprep.subr.mxu0 0.0
  %935 = vmatpush1.msra.mxu0 0.0
  %936 = vmatprep.mubr.f32.mxu0 0.0
  %937 = vmatmul.mubr.f32.gmra.mrb[0].mxu0 %v870
  %v938 = vpop.f32.mrb[0].mxu0
  %v939 = vadd.f32 0.0, %v938
  %v940 = vpop.f32.mrb[0].mxu0
  %941 = vdwg.mxu0
  %v942 = vadd.f32 %v866, %v939
  %v943 = vxor.u32 %v942, 2147483648
  %v944 = vmul.f32 %v943, 1.442695
  %v945 = vpow.pop %v944
  %v946 = vadd.f32 %v945, 1.0
  %v947 = vrcp.pop %v946
  %v948 = vmul.f32 1.0, %v947
  %v949 = vtanh.pop %v942
  %v950 = vmul.f32 %v948, %v858
  %952 = vrot.lane.b32.xlu0 %v949, 64
  %v953 = vpop.permute.xlu0 %952
  %v955 = vmul.f32 %v948, %v953
  %957 = vrot.lane.b32.xlu0 %v955, 32
  %v958 = vpop.permute.xlu0 %957
  %v960 = vadd.f32 %v950, %v958
  %v961 = vtanh.pop %v960
  %963 = vrot.lane.b32.xlu0 %v961, 64
  %v964 = vpop.permute.xlu0 %963
  %v966 = vmul.f32 %v948, %v964
  %s967 = scalar_lea.vmem [#allocation2], 48
  %v968 = vld [vmem:[%s967] sm:$0xff]
  %970 = vrot.lane.b32.xlu0 %v966, 32
  %v971 = vpop.permute.xlu0 %970
  %v972 = vsel %vm216, %v971, 0
  %974 = vmatprep.subr.mxu0 0.0
  %975 = vmatpush1.msra.mxu0 %v354
  %976 = vmatprep.subr.mxu0 0.0
  %977 = vmatpush1.msra.mxu0 %v355
  %978 = vmatprep.subr.mxu0 0.0
  %979 = vmatpush1.msra.mxu0 %v356
  %980 = vmatprep.subr.mxu0 0.0
  %981 = vmatpush1.msra.mxu0 %v357
  %982 = vmatprep.subr.mxu0 0.0
  %983 = vmatpush1.msra.mxu0 0.0
  %984 = vmatprep.subr.mxu0 0.0
  %985 = vmatpush1.msra.mxu0 0.0
  %986 = vmatprep.subr.mxu0 0.0
  %987 = vmatpush1.msra.mxu0 0.0
  %988 = vmatprep.subr.mxu0 0.0
  %989 = vmatpush1.msra.mxu0 0.0
  %990 = vmatprep.subr.mxu0 0.0
  %991 = vmatpush1.msra.mxu0 0.0
  %992 = vmatprep.subr.mxu0 0.0
  %993 = vmatpush1.msra.mxu0 0.0
  %994 = vmatprep.subr.mxu0 0.0
  %995 = vmatpush1.msra.mxu0 0.0
  %996 = vmatprep.subr.mxu0 0.0
  %997 = vmatpush1.msra.mxu0 0.0
  %998 = vmatprep.subr.mxu0 0.0
  %999 = vmatpush1.msra.mxu0 0.0
  %1000 = vmatprep.subr.mxu0 0.0
  %1001 = vmatpush1.msra.mxu0 0.0
  %1002 = vmatprep.subr.mxu0 0.0
  %1003 = vmatpush1.msra.mxu0 0.0
  %1004 = vmatprep.subr.mxu0 0.0
  %1005 = vmatpush1.msra.mxu0 0.0
  %1006 = vmatprep.subr.mxu0 0.0
  %1007 = vmatpush1.msra.mxu0 0.0
  %1008 = vmatprep.subr.mxu0 0.0
  %1009 = vmatpush1.msra.mxu0 0.0
  %1010 = vmatprep.subr.mxu0 0.0
  %1011 = vmatpush1.msra.mxu0 0.0
  %1012 = vmatprep.subr.mxu0 0.0
  %1013 = vmatpush1.msra.mxu0 0.0
  %1014 = vmatprep.subr.mxu0 0.0
  %1015 = vmatpush1.msra.mxu0 0.0
  %1016 = vmatprep.subr.mxu0 0.0
  %1017 = vmatpush1.msra.mxu0 0.0
  %1018 = vmatprep.subr.mxu0 0.0
  %1019 = vmatpush1.msra.mxu0 0.0
  %1020 = vmatprep.subr.mxu0 0.0
  %1021 = vmatpush1.msra.mxu0 0.0
  %1022 = vmatprep.subr.mxu0 0.0
  %1023 = vmatpush1.msra.mxu0 0.0
  %1024 = vmatprep.subr.mxu0 0.0
  %1025 = vmatpush1.msra.mxu0 0.0
  %1026 = vmatprep.subr.mxu0 0.0
  %1027 = vmatpush1.msra.mxu0 0.0
  %1028 = vmatprep.subr.mxu0 0.0
  %1029 = vmatpush1.msra.mxu0 0.0
  %1030 = vmatprep.subr.mxu0 0.0
  %1031 = vmatpush1.msra.mxu0 0.0
  %1032 = vmatprep.subr.mxu0 0.0
  %1033 = vmatpush1.msra.mxu0 0.0
  %1034 = vmatprep.subr.mxu0 0.0
  %1035 = vmatpush1.msra.mxu0 0.0
  %1036 = vmatprep.subr.mxu0 0.0
  %1037 = vmatpush1.msra.mxu0 0.0
  %1038 = vmatprep.mubr.f32.mxu0 0.0
  %1039 = vmatmul.mubr.f32.gmra.mrb[0].mxu0 %v972
  %v1040 = vpop.f32.mrb[0].mxu0
  %v1041 = vadd.f32 0.0, %v1040
  %v1042 = vpop.f32.mrb[0].mxu0
  %1043 = vdwg.mxu0
  %v1044 = vadd.f32 %v968, %v1041
  %v1045 = vxor.u32 %v1044, 2147483648
  %v1046 = vmul.f32 %v1045, 1.442695
  %v1047 = vpow.pop %v1046
  %v1048 = vadd.f32 %v1047, 1.0
  %v1049 = vrcp.pop %v1048
  %v1050 = vmul.f32 1.0, %v1049
  %v1051 = vtanh.pop %v1044
  %v1052 = vmul.f32 %v1050, %v960
  %1054 = vrot.lane.b32.xlu0 %v1051, 64
  %v1055 = vpop.permute.xlu0 %1054
  %v1057 = vmul.f32 %v1050, %v1055
  %1059 = vrot.lane.b32.xlu0 %v1057, 32
  %v1060 = vpop.permute.xlu0 %1059
  %v1062 = vadd.f32 %v1052, %v1060
  %v1063 = vtanh.pop %v1062
  %1065 = vrot.lane.b32.xlu0 %v1063, 64
  %v1066 = vpop.permute.xlu0 %1065
  %v1068 = vmul.f32 %v1050, %v1066
  %s1069 = scalar_lea.vmem [#allocation2], 56
  %v1070 = vld [vmem:[%s1069] sm:$0xff]
  %1072 = vrot.lane.b32.xlu0 %v1068, 32
  %v1073 = vpop.permute.xlu0 %1072
  %v1074 = vsel %vm216, %v1073, 0
  %1076 = vmatprep.subr.mxu0 0.0
  %1077 = vmatpush1.msra.mxu0 %v354
  %1078 = vmatprep.subr.mxu0 0.0
  %1079 = vmatpush1.msra.mxu0 %v355
  %1080 = vmatprep.subr.mxu0 0.0
  %1081 = vmatpush1.msra.mxu0 %v356
  %1082 = vmatprep.subr.mxu0 0.0
  %1083 = vmatpush1.msra.mxu0 %v357
  %1084 = vmatprep.subr.mxu0 0.0
  %1085 = vmatpush1.msra.mxu0 0.0
  %1086 = vmatprep.subr.mxu0 0.0
  %1087 = vmatpush1.msra.mxu0 0.0
  %1088 = vmatprep.subr.mxu0 0.0
  %1089 = vmatpush1.msra.mxu0 0.0
  %1090 = vmatprep.subr.mxu0 0.0
  %1091 = vmatpush1.msra.mxu0 0.0
  %1092 = vmatprep.subr.mxu0 0.0
  %1093 = vmatpush1.msra.mxu0 0.0
  %1094 = vmatprep.subr.mxu0 0.0
  %1095 = vmatpush1.msra.mxu0 0.0
  %1096 = vmatprep.subr.mxu0 0.0
  %1097 = vmatpush1.msra.mxu0 0.0
  %1098 = vmatprep.subr.mxu0 0.0
  %1099 = vmatpush1.msra.mxu0 0.0
  %1100 = vmatprep.subr.mxu0 0.0
  %1101 = vmatpush1.msra.mxu0 0.0
  %1102 = vmatprep.subr.mxu0 0.0
  %1103 = vmatpush1.msra.mxu0 0.0
  %1104 = vmatprep.subr.mxu0 0.0
  %1105 = vmatpush1.msra.mxu0 0.0
  %1106 = vmatprep.subr.mxu0 0.0
  %1107 = vmatpush1.msra.mxu0 0.0
  %1108 = vmatprep.subr.mxu0 0.0
  %1109 = vmatpush1.msra.mxu0 0.0
  %1110 = vmatprep.subr.mxu0 0.0
  %1111 = vmatpush1.msra.mxu0 0.0
  %1112 = vmatprep.subr.mxu0 0.0
  %1113 = vmatpush1.msra.mxu0 0.0
  %1114 = vmatprep.subr.mxu0 0.0
  %1115 = vmatpush1.msra.mxu0 0.0
  %1116 = vmatprep.subr.mxu0 0.0
  %1117 = vmatpush1.msra.mxu0 0.0
  %1118 = vmatprep.subr.mxu0 0.0
  %1119 = vmatpush1.msra.mxu0 0.0
  %1120 = vmatprep.subr.mxu0 0.0
  %1121 = vmatpush1.msra.mxu0 0.0
  %1122 = vmatprep.subr.mxu0 0.0
  %1123 = vmatpush1.msra.mxu0 0.0
  %1124 = vmatprep.subr.mxu0 0.0
  %1125 = vmatpush1.msra.mxu0 0.0
  %1126 = vmatprep.subr.mxu0 0.0
  %1127 = vmatpush1.msra.mxu0 0.0
  %1128 = vmatprep.subr.mxu0 0.0
  %1129 = vmatpush1.msra.mxu0 0.0
  %1130 = vmatprep.subr.mxu0 0.0
  %1131 = vmatpush1.msra.mxu0 0.0
  %1132 = vmatprep.subr.mxu0 0.0
  %1133 = vmatpush1.msra.mxu0 0.0
  %1134 = vmatprep.subr.mxu0 0.0
  %1135 = vmatpush1.msra.mxu0 0.0
  %1136 = vmatprep.subr.mxu0 0.0
  %1137 = vmatpush1.msra.mxu0 0.0
  %1138 = vmatprep.subr.mxu0 0.0
  %1139 = vmatpush1.msra.mxu0 0.0
  %1140 = vmatprep.mubr.f32.mxu0 0.0
  %1141 = vmatmul.mubr.f32.gmra.mrb[0].mxu0 %v1074
  %v1142 = vpop.f32.mrb[0].mxu0
  %v1143 = vadd.f32 0.0, %v1142
  %v1144 = vpop.f32.mrb[0].mxu0
  %1145 = vdwg.mxu0
  %v1146 = vadd.f32 %v1070, %v1143
  %v1147 = vxor.u32 %v1146, 2147483648
  %v1148 = vmul.f32 %v1147, 1.442695
  %v1149 = vpow.pop %v1148
  %v1150 = vadd.f32 %v1149, 1.0
  %v1151 = vrcp.pop %v1150
  %v1152 = vmul.f32 1.0, %v1151
  %v1153 = vtanh.pop %v1146
  %v1154 = vmul.f32 %v1152, %v1062
  %1156 = vrot.lane.b32.xlu0 %v1153, 64
  %v1157 = vpop.permute.xlu0 %1156
  %v1159 = vmul.f32 %v1152, %v1157
  %1161 = vrot.lane.b32.xlu0 %v1159, 32
  %v1162 = vpop.permute.xlu0 %1161
  %v1164 = vadd.f32 %v1154, %v1162
  %v1165 = vtanh.pop %v1164
  %1167 = vrot.lane.b32.xlu0 %v1165, 64
  %v1168 = vpop.permute.xlu0 %1167
  %v1170 = vmul.f32 %v1152, %v1168
  %v1171 = vld [vmem:[%s5] sm:$0xff]
  %v1172 = vld [vmem:[%s5 + $0x8] sm:$0xff]
  %v1173 = vld [vmem:[%s5 + $0x10] sm:$0xff]
  %v1174 = vld [vmem:[%s5 + $0x18] sm:$0xff]
  %v1175 = vld [vmem:[%s6] sm:$0x1]
  %v1177 = vlaneseq
  %v1178 = vshrl.u32 %v1177, 7
  %v1179 = vsub.s32 0, %v1178
  %v1180 = vrot.slane %v1175, %v1179
  %1183 = vrot.lane.b32.xlu0 %v1170, 32
  %v1184 = vpop.permute.xlu0 %1183
  %v1185 = vsel %vm216, %v1184, 0
  %1187 = vmatprep.subr.mxu0 0.0
  %1188 = vmatpush1.msra.mxu0 %v1171
  %1189 = vmatprep.subr.mxu0 0.0
  %1190 = vmatpush1.msra.mxu0 %v1172
  %1191 = vmatprep.subr.mxu0 0.0
  %1192 = vmatpush1.msra.mxu0 %v1173
  %1193 = vmatprep.subr.mxu0 0.0
  %1194 = vmatpush1.msra.mxu0 %v1174
  %1195 = vmatprep.subr.mxu0 0.0
  %1196 = vmatpush1.msra.mxu0 0.0
  %1197 = vmatprep.subr.mxu0 0.0
  %1198 = vmatpush1.msra.mxu0 0.0
  %1199 = vmatprep.subr.mxu0 0.0
  %1200 = vmatpush1.msra.mxu0 0.0
  %1201 = vmatprep.subr.mxu0 0.0
  %1202 = vmatpush1.msra.mxu0 0.0
  %1203 = vmatprep.subr.mxu0 0.0
  %1204 = vmatpush1.msra.mxu0 0.0
  %1205 = vmatprep.subr.mxu0 0.0
  %1206 = vmatpush1.msra.mxu0 0.0
  %1207 = vmatprep.subr.mxu0 0.0
  %1208 = vmatpush1.msra.mxu0 0.0
  %1209 = vmatprep.subr.mxu0 0.0
  %1210 = vmatpush1.msra.mxu0 0.0
  %1211 = vmatprep.subr.mxu0 0.0
  %1212 = vmatpush1.msra.mxu0 0.0
  %1213 = vmatprep.subr.mxu0 0.0
  %1214 = vmatpush1.msra.mxu0 0.0
  %1215 = vmatprep.subr.mxu0 0.0
  %1216 = vmatpush1.msra.mxu0 0.0
  %1217 = vmatprep.subr.mxu0 0.0
  %1218 = vmatpush1.msra.mxu0 0.0
  %1219 = vmatprep.subr.mxu0 0.0
  %1220 = vmatpush1.msra.mxu0 0.0
  %1221 = vmatprep.subr.mxu0 0.0
  %1222 = vmatpush1.msra.mxu0 0.0
  %1223 = vmatprep.subr.mxu0 0.0
  %1224 = vmatpush1.msra.mxu0 0.0
  %1225 = vmatprep.subr.mxu0 0.0
  %1226 = vmatpush1.msra.mxu0 0.0
  %1227 = vmatprep.subr.mxu0 0.0
  %1228 = vmatpush1.msra.mxu0 0.0
  %1229 = vmatprep.subr.mxu0 0.0
  %1230 = vmatpush1.msra.mxu0 0.0
  %1231 = vmatprep.subr.mxu0 0.0
  %1232 = vmatpush1.msra.mxu0 0.0
  %1233 = vmatprep.subr.mxu0 0.0
  %1234 = vmatpush1.msra.mxu0 0.0
  %1235 = vmatprep.subr.mxu0 0.0
  %1236 = vmatpush1.msra.mxu0 0.0
  %1237 = vmatprep.subr.mxu0 0.0
  %1238 = vmatpush1.msra.mxu0 0.0
  %1239 = vmatprep.subr.mxu0 0.0
  %1240 = vmatpush1.msra.mxu0 0.0
  %1241 = vmatprep.subr.mxu0 0.0
  %1242 = vmatpush1.msra.mxu0 0.0
  %1243 = vmatprep.subr.mxu0 0.0
  %1244 = vmatpush1.msra.mxu0 0.0
  %1245 = vmatprep.subr.mxu0 0.0
  %1246 = vmatpush1.msra.mxu0 0.0
  %1247 = vmatprep.subr.mxu0 0.0
  %1248 = vmatpush1.msra.mxu0 0.0
  %1249 = vmatprep.subr.mxu0 0.0
  %1250 = vmatpush1.msra.mxu0 0.0
  %1251 = vmatprep.mubr.f32.mxu0 0.0
  %1252 = vmatmul.mubr.f32.gmra.mrb[0].mxu0 %v1185
  %v1253 = vpop.f32.mrb[0].mxu0
  %v1254 = vadd.f32 %v1180, %v1253
  %v1255 = vpop.f32.mrb[0].mxu0
  %1256 = vdwg.mxu0
  %1257 = vst [vmem:[%s7] sm:$0xff] %v1254
  // Predicated region
  $region30: #{lstm_model_forward.1} parent=0 // pred_check
    _
  $region31: #{lstm_model_forward.1} parent=0 // pred_check_branch
    %1259 = sbr.rel (0) target = $region33
  $region32: #{lstm_model_forward.1} parent=0 // pred_region
    _
  $region33: #{lstm_model_forward.1} parent=0 // pred_fallthru
    _
  // Predicated region
  $region34: #{lstm_model_forward.1} parent=0 // pred_check
    _
  $region35: #{lstm_model_forward.1} parent=0 // pred_check_branch
    %1261 = sbr.rel (0) target = $region37
  $region36: #{lstm_model_forward.1} parent=0 // pred_region
    _
  $region37: #{lstm_model_forward.1} parent=0 // pred_fallthru
    _

</llo_original>
